<compile_context>
chip_gen: v6e
topology: v6e:2x2x1
jax: 0.10.0
libtpu: 0.0.40
codegen_flags: <defaults>
</compile_context>

<pallas_src>
import jax
import jax.numpy as jnp
from jax.experimental import pallas as pl
from jax.experimental.pallas import tpu as pltpu


def _ratio_kernel(bout_ref, pep_ref, gly_ref, bias_ref, wp_ref, wg_ref, out_ref):
    # One grid step == TB batch elements (TB peptides + TB glycan graphs).
    pep = pep_ref[...]                  # (TB, L*Fp) f32, lane-dense flattened rows
    gly = gly_ref[...]                  # (TB, N*Fg) f32
    gate_bias = bias_ref[...]           # (TB, N)    f32: 0 for valid node, -1e9 for padding

    # Per-position gate (s) and output-head (t) projections via block-diagonal weights
    # on the otherwise-idle MXU.  wp_ref: (2, L*Fp, L), wg_ref: (2, N*Fg, N).
    s_p = jnp.dot(pep, wp_ref[0], preferred_element_type=jnp.float32)   # (TB, L)
    t_p = jnp.dot(pep, wp_ref[1], preferred_element_type=jnp.float32)   # (TB, L)
    s_g = jnp.dot(gly, wg_ref[0], preferred_element_type=jnp.float32) + gate_bias  # (TB, N)
    t_g = jnp.dot(gly, wg_ref[1], preferred_element_type=jnp.float32)   # (TB, N)

    # ---- peptide AttentionSum with the output head folded in (pooling is linear) ----
    e_p = jnp.exp(s_p - jnp.max(s_p, axis=1, keepdims=True))
    logit_p = jnp.sum(e_p * t_p, axis=1) / jnp.sum(e_p, axis=1)          # (TB,)

    # ---- glycan GlobalAttentionPooling over valid monosaccharide nodes only --------
    # Padded nodes carry a -1e9 gate bias -> exp underflows to exactly 0; a fully
    # padded (batch-padding) row degrades to a finite uniform average of zeros (no NaN).
    e_g = jnp.exp(s_g - jnp.max(s_g, axis=1, keepdims=True))
    logit_g = jnp.sum(e_g * t_g, axis=1) / jnp.sum(e_g, axis=1)          # (TB,)

    # ---- output head bias + Sigmoid, lane-dense (1, TB) store -----------------------
    out_ref[...] = jax.nn.sigmoid(logit_p + logit_g + bout_ref[0])[None, :]


def _round_up(x, m):
    return ((x + m - 1) // m) * m


def _cdiv(a, b):
    return -(-a // b)


def _choose_batch_tile(B, in_vmem_bytes_per_elem):
    # Lane-padded accounting: double-buffered inputs + ~3 KiB/element of (TB, 128)-shaped
    # in-kernel temporaries, kept well under the explicit 48 MiB VMEM limit below.
    b128 = _round_up(max(B, 1), 128)
    per_elem = 2 * in_vmem_bytes_per_elem + 3 * 1024
    budget = 24 << 20
    tb = ((budget // per_elem) // 128) * 128
    tb = max(128, min(tb, 2048, b128))
    # v7x megacore: prefer an even number of grid steps when the batch spans >1 tile.
    nt = _cdiv(b128, tb)
    if nt > 1 and nt % 2 == 1:
        tb_even = _round_up(_cdiv(b128, nt + 1), 128)
        if tb_even >= 128 and _cdiv(b128, tb_even) % 2 == 0:
            tb = tb_even
    return tb


def _block_diag_weight(w_vec, positions):
    # (positions*F, positions); column j holds w_vec in rows j*F:(j+1)*F, zeros elsewhere.
    f = w_vec.shape[0]
    eye = jnp.eye(positions, dtype=jnp.float32)
    return (eye[:, None, :] * w_vec.astype(jnp.float32)[None, :, None]).reshape(
        positions * f, positions)


@jax.jit
def glyco_peptide_ms2_ratio_output(pep_feature, gly_feature, gly_num_nodes,
                                   w_pep, w_gly, w_out, b_out):
    B, L, Fp = pep_feature.shape
    _, N, Fg = gly_feature.shape
    Pc = L * Fp
    Gc = N * Fg

    # Lane-padded per-element VMEM input bytes (f32): pep row + gly row + gate-bias row.
    in_vmem = 4 * (_round_up(Pc, 128) + _round_up(Gc, 128) + _round_up(N, 128))
    tb = _choose_batch_tile(B, in_vmem)
    num_tiles = _cdiv(_round_up(B, 128), tb)
    b_pad = num_tiles * tb

    if b_pad != B:
        pad = b_pad - B
        pep_feature = jnp.pad(pep_feature, ((0, pad), (0, 0), (0, 0)))
        gly_feature = jnp.pad(gly_feature, ((0, pad), (0, 0), (0, 0)))
        gly_num_nodes = jnp.pad(gly_num_nodes, (0, pad))     # padded rows -> 0 valid nodes

    # Free, contiguous flattens -> lane-dense DMA rows.
    pep_flat = pep_feature.astype(jnp.float32).reshape(b_pad, Pc)
    gly_flat = gly_feature.astype(jnp.float32).reshape(b_pad, Gc)

    # Additive gate bias rebuilding the per-graph node mask: 0 valid, -1e9 padded.
    node_idx = jnp.arange(N, dtype=jnp.int32)[None, :]
    valid = node_idx < gly_num_nodes.astype(jnp.int32)[:, None]
    gate_bias = jnp.where(valid, 0.0, -1e9).astype(jnp.float32)          # (b_pad, N)

    # Block-diagonal weights: [0] = attention gate, [1] = matching output-head half.
    wp_blk = jnp.stack([_block_diag_weight(w_pep.reshape(Fp), L),
                        _block_diag_weight(w_out[:Fp, 0], L)], axis=0)           # (2, Pc, L)
    wg_blk = jnp.stack([_block_diag_weight(w_gly.reshape(Fg), N),
                        _block_diag_weight(w_out[Fp:Fp + Fg, 0], N)], axis=0)    # (2, Gc, N)
    bvec = jnp.reshape(b_out, (1,)).astype(jnp.float32)                  # SMEM scalar

    out = pl.pallas_call(
        _ratio_kernel,
        out_shape=jax.ShapeDtypeStruct((1, b_pad), jnp.float32),
        grid_spec=pltpu.PrefetchScalarGridSpec(
            num_scalar_prefetch=1,                                  # output bias -> SMEM
            grid=(num_tiles,),
            in_specs=[
                pl.BlockSpec((tb, Pc), lambda i, b: (i, 0)),        # peptide rows
                pl.BlockSpec((tb, Gc), lambda i, b: (i, 0)),        # glycan rows
                pl.BlockSpec((tb, N), lambda i, b: (i, 0)),         # gate bias (node mask)
                pl.BlockSpec((2, Pc, L), lambda i, b: (0, 0, 0)),   # resident pep weights
                pl.BlockSpec((2, Gc, N), lambda i, b: (0, 0, 0)),   # resident gly weights
            ],
            out_specs=pl.BlockSpec((1, tb), lambda i, b: (0, i)),   # lane-dense output
        ),
        compiler_params=pltpu.CompilerParams(
            dimension_semantics=("parallel",),
            vmem_limit_bytes=48 << 20),
    )(bvec, pep_flat, gly_flat, gate_bias, wp_blk, wg_blk)

    # Padded batch rows hold sigmoid(b_out)-style garbage; they are sliced off here and
    # must never be consumed from the (1, b_pad) buffer directly.
    return out.reshape(b_pad)[:B]


def _reference(pep_feature, gly_feature, gly_num_nodes, w_pep, w_gly, w_out, b_out):
    # Plain-JAX mirror of the PyTorch forward (full-f32 elementwise math, no MXU).
    s_pep = jnp.sum(pep_feature * w_pep[:, 0], axis=-1)                  # (B, L)
    a_pep = jax.nn.softmax(s_pep, axis=1)[..., None]
    pep = jnp.sum(a_pep * pep_feature, axis=1)                           # (B, Fp)

    N = gly_feature.shape[1]
    mask = jnp.arange(N)[None, :] < gly_num_nodes[:, None]
    s_gly = jnp.sum(gly_feature * w_gly[:, 0], axis=-1)                  # (B, N)
    s_gly = jnp.where(mask, s_gly, -1e9)
    e_gly = jnp.exp(s_gly - jnp.max(s_gly, axis=1, keepdims=True)) * mask.astype(jnp.float32)
    a_gly = (e_gly / jnp.maximum(jnp.sum(e_gly, axis=1, keepdims=True), 1e-30))[..., None]
    gly = jnp.sum(a_gly * gly_feature, axis=1)                           # (B, Fg)

    feat = jnp.concatenate([pep, gly], axis=-1)                          # (B, Fp+Fg)
    logit = jnp.sum(feat * w_out[:, 0], axis=-1) + b_out.reshape(())
    return jax.nn.sigmoid(logit)                                         # (B,)


if __name__ == "__main__":
    # Small synthetic shapes consistent with the module's forward.
    B, L, N = 2, 8, 8          # batch, peptide seq len, max glycan nodes
    Fp, Fg = 32, 16            # pep_features, gly_features

    key = jax.random.PRNGKey(0)
    k1, k2, k3, k4, k5, k6 = jax.random.split(key, 6)

    pep_feature = jax.random.normal(k1, (B, L, Fp), dtype=jnp.float32)
    gly_feature = jax.random.normal(k2, (B, N, Fg), dtype=jnp.float32)

    # Variable node counts per glycan graph (dgl batch_num_nodes('monosaccharide')).
    # Padded node slots intentionally keep nonzero features to exercise the masking.
    gly_num_nodes = jnp.array([N, 5], dtype=jnp.int32)

    # Deterministic parameter init (synthetic, not a checkpoint load).
    w_pep = 0.1 * jax.random.normal(k3, (Fp, 1), dtype=jnp.float32)        # AttentionSum gate
    w_gly = 0.1 * jax.random.normal(k4, (Fg, 1), dtype=jnp.float32)        # GlobalAttentionPooling gate
    w_out = 0.1 * jax.random.normal(k5, (Fp + Fg, 1), dtype=jnp.float32)   # output Linear weight
    b_out = 0.1 * jax.random.normal(k6, (1, 1), dtype=jnp.float32)         # output Linear bias

    ratio = glyco_peptide_ms2_ratio_output(
        pep_feature, gly_feature, gly_num_nodes, w_pep, w_gly, w_out, b_out)
    jax.block_until_ready(ratio)

    ref = _reference(pep_feature, gly_feature, gly_num_nodes,
                     w_pep, w_gly, w_out, b_out)
    assert ratio.shape == (B,)
    # Tolerance leaves headroom for the TPU MXU's reduced-precision f32 passes on the
    # tiny in-kernel gate/head projections (reference uses exact f32 VPU math).
    assert jnp.allclose(ratio, ref, rtol=1e-3, atol=2e-3), (ratio, ref)

    print("KERNEL_OK")
</pallas_src>

<mosaic_0001>
module attributes {stable_mosaic.version = 11 : i64} {
  func.func @_ratio_kernel(%arg0: i32, %arg1: memref<1xf32, #tpu.memory_space<smem>>, %arg2: memref<128x256xf32, #tpu.memory_space<vmem>>, %arg3: memref<128x128xf32, #tpu.memory_space<vmem>>, %arg4: memref<128x8xf32, #tpu.memory_space<vmem>>, %arg5: memref<2x256x8xf32, #tpu.memory_space<vmem>>, %arg6: memref<2x128x8xf32, #tpu.memory_space<vmem>>, %arg7: memref<1x128xf32, #tpu.memory_space<vmem>>) attributes {dimension_semantics = [#tpu.dimension_semantics<parallel>], iteration_bounds = array<i64: 1>, scalar_prefetch = 1 : i64, scratch_operands = 0 : i64, tpu.core_type = #tpu.core_type<tc>, window_params = [{transform_indices = @transform_0, window_bounds = array<i64: 128, 256>}, {transform_indices = @transform_1, window_bounds = array<i64: 128, 128>}, {transform_indices = @transform_2, window_bounds = array<i64: 128, 8>}, {pipeline_mode = #tpu.pipeline_mode<synchronous>, transform_indices = @transform_3, window_bounds = array<i64: 2, 256, 8>}, {pipeline_mode = #tpu.pipeline_mode<synchronous>, transform_indices = @transform_4, window_bounds = array<i64: 2, 128, 8>}, {transform_indices = @transform_5, window_bounds = array<i64: 1, 128>}]} {
    %c0 = arith.constant 0 : index
    %c0_0 = arith.constant 0 : index
    %0 = vector.load %arg2[%c0, %c0_0] : memref<128x256xf32, #tpu.memory_space<vmem>>, vector<128x256xf32>
    %c0_1 = arith.constant 0 : index
    %c0_2 = arith.constant 0 : index
    %1 = vector.load %arg3[%c0_1, %c0_2] : memref<128x128xf32, #tpu.memory_space<vmem>>, vector<128x128xf32>
    %c0_3 = arith.constant 0 : index
    %c0_4 = arith.constant 0 : index
    %2 = vector.load %arg4[%c0_3, %c0_4] : memref<128x8xf32, #tpu.memory_space<vmem>>, vector<128x8xf32>
    %c0_5 = arith.constant 0 : index
    %c0_6 = arith.constant 0 : index
    %c0_7 = arith.constant 0 : index
    %3 = vector.load %arg5[%c0_5, %c0_6, %c0_7] : memref<2x256x8xf32, #tpu.memory_space<vmem>>, vector<1x256x8xf32>
    %4 = vector.shape_cast %3 : vector<1x256x8xf32> to vector<256x8xf32>
    %cst = arith.constant dense<0.000000e+00> : vector<128x8xf32>
    %5 = tpu.matmul %0, %4, %cst {dimension_numbers = #tpu.dot_dimension_numbers<[1], [0], [0], [1], [0, 0, 1, 1], [], []>} : vector<128x256xf32>, vector<256x8xf32>, vector<128x8xf32> -> vector<128x8xf32>
    %c1 = arith.constant 1 : index
    %c0_8 = arith.constant 0 : index
    %c0_9 = arith.constant 0 : index
    %6 = vector.load %arg5[%c1, %c0_8, %c0_9] : memref<2x256x8xf32, #tpu.memory_space<vmem>>, vector<1x256x8xf32>
    %7 = vector.shape_cast %6 : vector<1x256x8xf32> to vector<256x8xf32>
    %cst_10 = arith.constant dense<0.000000e+00> : vector<128x8xf32>
    %8 = tpu.matmul %0, %7, %cst_10 {dimension_numbers = #tpu.dot_dimension_numbers<[1], [0], [0], [1], [0, 0, 1, 1], [], []>} : vector<128x256xf32>, vector<256x8xf32>, vector<128x8xf32> -> vector<128x8xf32>
    %c0_11 = arith.constant 0 : index
    %c0_12 = arith.constant 0 : index
    %c0_13 = arith.constant 0 : index
    %9 = vector.load %arg6[%c0_11, %c0_12, %c0_13] : memref<2x128x8xf32, #tpu.memory_space<vmem>>, vector<1x128x8xf32>
    %10 = vector.shape_cast %9 : vector<1x128x8xf32> to vector<128x8xf32>
    %cst_14 = arith.constant dense<0.000000e+00> : vector<128x8xf32>
    %11 = tpu.matmul %1, %10, %cst_14 {dimension_numbers = #tpu.dot_dimension_numbers<[1], [0], [0], [1], [0, 0, 1, 1], [], []>} : vector<128x128xf32>, vector<128x8xf32>, vector<128x8xf32> -> vector<128x8xf32>
    %12 = arith.addf %11, %2 : vector<128x8xf32>
    %c1_15 = arith.constant 1 : index
    %c0_16 = arith.constant 0 : index
    %c0_17 = arith.constant 0 : index
    %13 = vector.load %arg6[%c1_15, %c0_16, %c0_17] : memref<2x128x8xf32, #tpu.memory_space<vmem>>, vector<1x128x8xf32>
    %14 = vector.shape_cast %13 : vector<1x128x8xf32> to vector<128x8xf32>
    %cst_18 = arith.constant dense<0.000000e+00> : vector<128x8xf32>
    %15 = tpu.matmul %1, %14, %cst_18 {dimension_numbers = #tpu.dot_dimension_numbers<[1], [0], [0], [1], [0, 0, 1, 1], [], []>} : vector<128x128xf32>, vector<128x8xf32>, vector<128x8xf32> -> vector<128x8xf32>
    %cst_19 = arith.constant dense<0xFF800000> : vector<128xf32>
    %16 = vector.multi_reduction <maximumf>, %5, %cst_19 [1] : vector<128x8xf32> to vector<128xf32>
    %17 = vector.shape_cast %16 : vector<128xf32> to vector<128x1xf32>
    %18 = vector.broadcast %17 : vector<128x1xf32> to vector<128x8xf32>
    %19 = arith.subf %5, %18 : vector<128x8xf32>
    %20 = math.exp %19 : vector<128x8xf32>
    %21 = arith.mulf %20, %8 : vector<128x8xf32>
    %cst_20 = arith.constant dense<0.000000e+00> : vector<128xf32>
    %22 = vector.multi_reduction <add>, %21, %cst_20 [1] : vector<128x8xf32> to vector<128xf32>
    %cst_21 = arith.constant dense<0.000000e+00> : vector<128xf32>
    %23 = vector.multi_reduction <add>, %20, %cst_21 [1] : vector<128x8xf32> to vector<128xf32>
    %24 = arith.divf %22, %23 : vector<128xf32>
    %cst_22 = arith.constant dense<0xFF800000> : vector<128xf32>
    %25 = vector.multi_reduction <maximumf>, %12, %cst_22 [1] : vector<128x8xf32> to vector<128xf32>
    %26 = vector.shape_cast %25 : vector<128xf32> to vector<128x1xf32>
    %27 = vector.broadcast %26 : vector<128x1xf32> to vector<128x8xf32>
    %28 = arith.subf %12, %27 : vector<128x8xf32>
    %29 = math.exp %28 : vector<128x8xf32>
    %30 = arith.mulf %29, %15 : vector<128x8xf32>
    %cst_23 = arith.constant dense<0.000000e+00> : vector<128xf32>
    %31 = vector.multi_reduction <add>, %30, %cst_23 [1] : vector<128x8xf32> to vector<128xf32>
    %cst_24 = arith.constant dense<0.000000e+00> : vector<128xf32>
    %32 = vector.multi_reduction <add>, %29, %cst_24 [1] : vector<128x8xf32> to vector<128xf32>
    %33 = arith.divf %31, %32 : vector<128xf32>
    %34 = arith.addf %24, %33 : vector<128xf32>
    %c0_25 = arith.constant 0 : index
    %35 = memref.load %arg1[%c0_25] : memref<1xf32, #tpu.memory_space<smem>>
    %36 = vector.broadcast %35 : f32 to vector<128xf32>
    %37 = arith.addf %34, %36 : vector<128xf32>
    %38 = arith.negf %37 : vector<128xf32>
    %39 = math.exp %38 : vector<128xf32>
    %cst_26 = arith.constant 1.000000e+00 : f32
    %40 = vector.broadcast %cst_26 : f32 to vector<128xf32>
    %41 = arith.addf %40, %39 : vector<128xf32>
    %42 = arith.divf %40, %41 : vector<128xf32>
    %43 = vector.shape_cast %42 : vector<128xf32> to vector<1x128xf32>
    %c0_27 = arith.constant 0 : index
    %c0_28 = arith.constant 0 : index
    %44 = vector.load %arg7[%c0_27, %c0_28] : memref<1x128xf32, #tpu.memory_space<vmem>>, vector<1x128xf32>
    tpu.vector_store %arg7[%c0_27, %c0_28], %43 {strides = array<i32>} : memref<1x128xf32, #tpu.memory_space<vmem>>, vector<1x128xf32>,
    return
  }
  func.func @transform_0(%arg0: i32, %arg1: memref<1xf32, #tpu.memory_space<smem>>) -> (i32, i32) {
    %c0_i32 = arith.constant 0 : i32
    %c0_i32_0 = arith.constant 0 : i32
    return %arg0, %c0_i32 : i32, i32
  }
  func.func @transform_1(%arg0: i32, %arg1: memref<1xf32, #tpu.memory_space<smem>>) -> (i32, i32) {
    %c0_i32 = arith.constant 0 : i32
    %c0_i32_0 = arith.constant 0 : i32
    return %arg0, %c0_i32 : i32, i32
  }
  func.func @transform_2(%arg0: i32, %arg1: memref<1xf32, #tpu.memory_space<smem>>) -> (i32, i32) {
    %c0_i32 = arith.constant 0 : i32
    %c0_i32_0 = arith.constant 0 : i32
    return %arg0, %c0_i32 : i32, i32
  }
  func.func @transform_3(%arg0: i32, %arg1: memref<1xf32, #tpu.memory_space<smem>>) -> (i32, i32, i32) {
    %c0_i32 = arith.constant 0 : i32
    %c0_i32_0 = arith.constant 0 : i32
    %c0_i32_1 = arith.constant 0 : i32
    %c0_i32_2 = arith.constant 0 : i32
    return %c0_i32, %c0_i32_0, %c0_i32_1 : i32, i32, i32
  }
  func.func @transform_4(%arg0: i32, %arg1: memref<1xf32, #tpu.memory_space<smem>>) -> (i32, i32, i32) {
    %c0_i32 = arith.constant 0 : i32
    %c0_i32_0 = arith.constant 0 : i32
    %c0_i32_1 = arith.constant 0 : i32
    %c0_i32_2 = arith.constant 0 : i32
    return %c0_i32, %c0_i32_0, %c0_i32_1 : i32, i32, i32
  }
  func.func @transform_5(%arg0: i32, %arg1: memref<1xf32, #tpu.memory_space<smem>>) -> (i32, i32) {
    %c0_i32 = arith.constant 0 : i32
    %c0_i32_0 = arith.constant 0 : i32
    return %c0_i32, %arg0 : i32, i32
  }
}

</mosaic_0001>

<llo_original>
// kernel: glyco_peptide_ms2_ratio_output.1
$region0: #{glyco_peptide_ms2_ratio_output.1}
  #allocation0 [shape = 'u32[]', space=smem, size = 0x4, offset = 0x4, fixed_abs, tag = 'smem constant byte address 0x4 - core index']
  #allocation1 [shape = 'u32[144,128]{1,0:T(1,128)}', space=vmem, size = 0x12000, scoped, tag = 'internal scratch']
  #allocation2 [shape = 's32[1]{0}', space=sflag, size = 0x4, scoped, tag = 'scoped memory for glyco_peptide_ms2_ratio_output.1']
  #allocation3 [shape = 'f32[1]{0:T(128)S(6)}', space=smem, size = 0x200, scoped, tag = 'prefetched SMEM operand 0']
  %s0 = inlined_call_operand.<no memory space> [shape: f32[1], index: 0, kind: input, shape index: {}]
  %s1 = inlined_call_operand.vmem [shape: f32[128,256], index: 1, kind: input, shape index: {}]
  %s2 = inlined_call_operand.vmem [shape: f32[128,128], index: 2, kind: input, shape index: {}]
  %s3 = inlined_call_operand.vmem [shape: f32[128,8], index: 3, kind: input, shape index: {}]
  %s4 = inlined_call_operand.vmem [shape: f32[2,256,8], index: 4, kind: input, shape index: {}]
  %s5 = inlined_call_operand.vmem [shape: f32[2,128,8], index: 5, kind: input, shape index: {}]
  %s6 = inlined_call_operand.vmem [shape: f32[1,128], index: 6, kind: output, shape index: {}]
  %s7 = sld [smem:[#allocation0]]
  $region30: #{glyco_peptide_ms2_ratio_output.1} parent=0
    _
  %s9 = ssub.s32 1, %s7
  %s10 = scalar_select 0, %s9, %s7
  %11 = sst [smem:[#allocation3]] %s0
  // Predicated region
  $region2: #{glyco_peptide_ms2_ratio_output.1} parent=0 // pred_check
    _
  $region3: #{glyco_peptide_ms2_ratio_output.1} parent=0 // pred_check_branch
    %13 = sbr.rel (0) target = $region5
  $region4: #{glyco_peptide_ms2_ratio_output.1} parent=0 // pred_region
    _
  $region5: #{glyco_peptide_ms2_ratio_output.1} parent=0 // pred_fallthru
    _
  // Predicated region
  $region6: #{glyco_peptide_ms2_ratio_output.1} parent=0 // pred_check
    _
  $region7: #{glyco_peptide_ms2_ratio_output.1} parent=0 // pred_check_branch
    %15 = sbr.rel (0) target = $region9
  $region8: #{glyco_peptide_ms2_ratio_output.1} parent=0 // pred_region
    _
  $region9: #{glyco_peptide_ms2_ratio_output.1} parent=0 // pred_fallthru
    _
  // Predicated region
  $region10: #{glyco_peptide_ms2_ratio_output.1} parent=0 // pred_check
    _
  $region11: #{glyco_peptide_ms2_ratio_output.1} parent=0 // pred_check_branch
    %17 = sbr.rel (0) target = $region13
  $region12: #{glyco_peptide_ms2_ratio_output.1} parent=0 // pred_region
    _
  $region13: #{glyco_peptide_ms2_ratio_output.1} parent=0 // pred_fallthru
    _
  // Predicated region
  $region14: #{glyco_peptide_ms2_ratio_output.1} parent=0 // pred_check
    _
  $region15: #{glyco_peptide_ms2_ratio_output.1} parent=0 // pred_check_branch
    %19 = sbr.rel (0) target = $region17
  $region16: #{glyco_peptide_ms2_ratio_output.1} parent=0 // pred_region
    _
  $region17: #{glyco_peptide_ms2_ratio_output.1} parent=0 // pred_fallthru
    _
  // Predicated region
  $region18: #{glyco_peptide_ms2_ratio_output.1} parent=0 // pred_check
    _
  $region19: #{glyco_peptide_ms2_ratio_output.1} parent=0 // pred_check_branch
    %21 = sbr.rel (0) target = $region21
  $region20: #{glyco_peptide_ms2_ratio_output.1} parent=0 // pred_region
    _
  $region21: #{glyco_peptide_ms2_ratio_output.1} parent=0 // pred_fallthru
    _
  %v22 = vld [vmem:[%s1] sm:$0xff]
  %v23 = vld [vmem:[%s1 + $0x8] sm:$0xff]
  %v24 = vld [vmem:[%s1 + $0x10] sm:$0xff]
  %v25 = vld [vmem:[%s1 + $0x18] sm:$0xff]
  %v26 = vld [vmem:[%s1 + $0x20] sm:$0xff]
  %v27 = vld [vmem:[%s1 + $0x28] sm:$0xff]
  %v28 = vld [vmem:[%s1 + $0x30] sm:$0xff]
  %v29 = vld [vmem:[%s1 + $0x38] sm:$0xff]
  %v30 = vld [vmem:[%s1 + $0x40] sm:$0xff]
  %v31 = vld [vmem:[%s1 + $0x48] sm:$0xff]
  %v32 = vld [vmem:[%s1 + $0x50] sm:$0xff]
  %v33 = vld [vmem:[%s1 + $0x58] sm:$0xff]
  %v34 = vld [vmem:[%s1 + $0x60] sm:$0xff]
  %v35 = vld [vmem:[%s1 + $0x68] sm:$0xff]
  %v36 = vld [vmem:[%s1 + $0x70] sm:$0xff]
  %v37 = vld [vmem:[%s1 + $0x78] sm:$0xff]
  %v38 = vld [vmem:[%s1 + $0x80] sm:$0xff]
  %v39 = vld [vmem:[%s1 + $0x88] sm:$0xff]
  %v40 = vld [vmem:[%s1 + $0x90] sm:$0xff]
  %v41 = vld [vmem:[%s1 + $0x98] sm:$0xff]
  %v42 = vld [vmem:[%s1 + $0xa0] sm:$0xff]
  %v43 = vld [vmem:[%s1 + $0xa8] sm:$0xff]
  %v44 = vld [vmem:[%s1 + $0xb0] sm:$0xff]
  %v45 = vld [vmem:[%s1 + $0xb8] sm:$0xff]
  %v46 = vld [vmem:[%s1 + $0xc0] sm:$0xff]
  %v47 = vld [vmem:[%s1 + $0xc8] sm:$0xff]
  %v48 = vld [vmem:[%s1 + $0xd0] sm:$0xff]
  %v49 = vld [vmem:[%s1 + $0xd8] sm:$0xff]
  %v50 = vld [vmem:[%s1 + $0xe0] sm:$0xff]
  %v51 = vld [vmem:[%s1 + $0xe8] sm:$0xff]
  %v52 = vld [vmem:[%s1 + $0xf0] sm:$0xff]
  %v53 = vld [vmem:[%s1 + $0xf8] sm:$0xff]
  %v54 = vld [vmem:[%s2] sm:$0xff]
  %v55 = vld [vmem:[%s2 + $0x8] sm:$0xff]
  %v56 = vld [vmem:[%s2 + $0x10] sm:$0xff]
  %v57 = vld [vmem:[%s2 + $0x18] sm:$0xff]
  %v58 = vld [vmem:[%s2 + $0x20] sm:$0xff]
  %v59 = vld [vmem:[%s2 + $0x28] sm:$0xff]
  %v60 = vld [vmem:[%s2 + $0x30] sm:$0xff]
  %v61 = vld [vmem:[%s2 + $0x38] sm:$0xff]
  %v62 = vld [vmem:[%s2 + $0x40] sm:$0xff]
  %v63 = vld [vmem:[%s2 + $0x48] sm:$0xff]
  %v64 = vld [vmem:[%s2 + $0x50] sm:$0xff]
  %v65 = vld [vmem:[%s2 + $0x58] sm:$0xff]
  %v66 = vld [vmem:[%s2 + $0x60] sm:$0xff]
  %v67 = vld [vmem:[%s2 + $0x68] sm:$0xff]
  %v68 = vld [vmem:[%s2 + $0x70] sm:$0xff]
  %v69 = vld [vmem:[%s2 + $0x78] sm:$0xff]
  %v70 = vld [vmem:[%s3] sm:$0xff]
  %v71 = vld [vmem:[%s3 + $0x8] sm:$0xff]
  %v72 = vld [vmem:[%s3 + $0x10] sm:$0xff]
  %v73 = vld [vmem:[%s3 + $0x18] sm:$0xff]
  %v74 = vld [vmem:[%s3 + $0x20] sm:$0xff]
  %v75 = vld [vmem:[%s3 + $0x28] sm:$0xff]
  %v76 = vld [vmem:[%s3 + $0x30] sm:$0xff]
  %v77 = vld [vmem:[%s3 + $0x38] sm:$0xff]
  %v78 = vld [vmem:[%s3 + $0x40] sm:$0xff]
  %v79 = vld [vmem:[%s3 + $0x48] sm:$0xff]
  %v80 = vld [vmem:[%s3 + $0x50] sm:$0xff]
  %v81 = vld [vmem:[%s3 + $0x58] sm:$0xff]
  %v82 = vld [vmem:[%s3 + $0x60] sm:$0xff]
  %v83 = vld [vmem:[%s3 + $0x68] sm:$0xff]
  %v84 = vld [vmem:[%s3 + $0x70] sm:$0xff]
  %v85 = vld [vmem:[%s3 + $0x78] sm:$0xff]
  %v86 = vld [vmem:[%s4] sm:$0xff]
  %v87 = vld [vmem:[%s4 + $0x8] sm:$0xff]
  %v88 = vld [vmem:[%s4 + $0x10] sm:$0xff]
  %v89 = vld [vmem:[%s4 + $0x18] sm:$0xff]
  %v90 = vld [vmem:[%s4 + $0x20] sm:$0xff]
  %v91 = vld [vmem:[%s4 + $0x28] sm:$0xff]
  %v92 = vld [vmem:[%s4 + $0x30] sm:$0xff]
  %v93 = vld [vmem:[%s4 + $0x38] sm:$0xff]
  %v94 = vld [vmem:[%s4 + $0x40] sm:$0xff]
  %v95 = vld [vmem:[%s4 + $0x48] sm:$0xff]
  %v96 = vld [vmem:[%s4 + $0x50] sm:$0xff]
  %v97 = vld [vmem:[%s4 + $0x58] sm:$0xff]
  %v98 = vld [vmem:[%s4 + $0x60] sm:$0xff]
  %v99 = vld [vmem:[%s4 + $0x68] sm:$0xff]
  %v100 = vld [vmem:[%s4 + $0x70] sm:$0xff]
  %v101 = vld [vmem:[%s4 + $0x78] sm:$0xff]
  %v102 = vld [vmem:[%s4 + $0x80] sm:$0xff]
  %v103 = vld [vmem:[%s4 + $0x88] sm:$0xff]
  %v104 = vld [vmem:[%s4 + $0x90] sm:$0xff]
  %v105 = vld [vmem:[%s4 + $0x98] sm:$0xff]
  %v106 = vld [vmem:[%s4 + $0xa0] sm:$0xff]
  %v107 = vld [vmem:[%s4 + $0xa8] sm:$0xff]
  %v108 = vld [vmem:[%s4 + $0xb0] sm:$0xff]
  %v109 = vld [vmem:[%s4 + $0xb8] sm:$0xff]
  %v110 = vld [vmem:[%s4 + $0xc0] sm:$0xff]
  %v111 = vld [vmem:[%s4 + $0xc8] sm:$0xff]
  %v112 = vld [vmem:[%s4 + $0xd0] sm:$0xff]
  %v113 = vld [vmem:[%s4 + $0xd8] sm:$0xff]
  %v114 = vld [vmem:[%s4 + $0xe0] sm:$0xff]
  %v115 = vld [vmem:[%s4 + $0xe8] sm:$0xff]
  %v116 = vld [vmem:[%s4 + $0xf0] sm:$0xff]
  %v117 = vld [vmem:[%s4 + $0xf8] sm:$0xff]
  %118 = vmatprep.subr.mxu0 0.0
  %119 = vmatpush1.msra.mxu0 %v101
  %120 = vmatprep.subr.mxu0 0.0
  %121 = vmatpush1.msra.mxu0 %v100
  %122 = vmatprep.subr.mxu0 0.0
  %123 = vmatpush1.msra.mxu0 %v99
  %124 = vmatprep.subr.mxu0 0.0
  %125 = vmatpush1.msra.mxu0 %v98
  %126 = vmatprep.subr.mxu0 0.0
  %127 = vmatpush1.msra.mxu0 %v97
  %128 = vmatprep.subr.mxu0 0.0
  %129 = vmatpush1.msra.mxu0 %v96
  %130 = vmatprep.subr.mxu0 0.0
  %131 = vmatpush1.msra.mxu0 %v95
  %132 = vmatprep.subr.mxu0 0.0
  %133 = vmatpush1.msra.mxu0 %v94
  %134 = vmatprep.subr.mxu0 0.0
  %135 = vmatpush1.msra.mxu0 %v93
  %136 = vmatprep.subr.mxu0 0.0
  %137 = vmatpush1.msra.mxu0 %v92
  %138 = vmatprep.subr.mxu0 0.0
  %139 = vmatpush1.msra.mxu0 %v91
  %140 = vmatprep.subr.mxu0 0.0
  %141 = vmatpush1.msra.mxu0 %v90
  %142 = vmatprep.subr.mxu0 0.0
  %143 = vmatpush1.msra.mxu0 %v89
  %144 = vmatprep.subr.mxu0 0.0
  %145 = vmatpush1.msra.mxu0 %v88
  %146 = vmatprep.subr.mxu0 0.0
  %147 = vmatpush1.msra.mxu0 %v87
  %148 = vmatprep.subr.mxu0 0.0
  %149 = vmatpush1.msra.mxu0 %v86
  %150 = vmatprep.subr.mxu0 0.0
  %151 = vmatpush2.msra.mxu0 %v117
  %152 = vmatprep.subr.mxu0 0.0
  %153 = vmatpush2.msra.mxu0 %v116
  %154 = vmatprep.subr.mxu0 0.0
  %155 = vmatpush2.msra.mxu0 %v115
  %156 = vmatprep.subr.mxu0 0.0
  %157 = vmatpush2.msra.mxu0 %v114
  %158 = vmatprep.subr.mxu0 0.0
  %159 = vmatpush2.msra.mxu0 %v113
  %160 = vmatprep.subr.mxu0 0.0
  %161 = vmatpush2.msra.mxu0 %v112
  %162 = vmatprep.subr.mxu0 0.0
  %163 = vmatpush2.msra.mxu0 %v111
  %164 = vmatprep.subr.mxu0 0.0
  %165 = vmatpush2.msra.mxu0 %v110
  %166 = vmatprep.subr.mxu0 0.0
  %167 = vmatpush2.msra.mxu0 %v109
  %168 = vmatprep.subr.mxu0 0.0
  %169 = vmatpush2.msra.mxu0 %v108
  %170 = vmatprep.subr.mxu0 0.0
  %171 = vmatpush2.msra.mxu0 %v107
  %172 = vmatprep.subr.mxu0 0.0
  %173 = vmatpush2.msra.mxu0 %v106
  %174 = vmatprep.subr.mxu0 0.0
  %175 = vmatpush2.msra.mxu0 %v105
  %176 = vmatprep.subr.mxu0 0.0
  %177 = vmatpush2.msra.mxu0 %v104
  %178 = vmatprep.subr.mxu0 0.0
  %179 = vmatpush2.msra.mxu0 %v103
  %180 = vmatprep.subr.mxu0 0.0
  %181 = vmatpush2.msra.mxu0 %v102
  %182 = vmatprep.mubr.f32.mxu0 %v23
  %183 = vmatmul.mubr.f32.gmra.mxu0 %v22
  %v184 = vpop.f32.mrf.mxu0
  %v185 = vadd.f32 0.0, %v184
  %v186 = vpop.f32.mrf.mxu0
  %187 = vmatprep.mubr.f32.mxu0 %v25
  %188 = vmatmul.mubr.f32.gmra.mxu0 %v24
  %v189 = vpop.f32.mrf.mxu0
  %v190 = vadd.f32 0.0, %v189
  %v191 = vpop.f32.mrf.mxu0
  %192 = vmatprep.mubr.f32.mxu0 %v27
  %193 = vmatmul.mubr.f32.gmra.mxu0 %v26
  %v194 = vpop.f32.mrf.mxu0
  %v195 = vadd.f32 0.0, %v194
  %v196 = vpop.f32.mrf.mxu0
  %197 = vmatprep.mubr.f32.mxu0 %v29
  %198 = vmatmul.mubr.f32.gmra.mxu0 %v28
  %v199 = vpop.f32.mrf.mxu0
  %v200 = vadd.f32 0.0, %v199
  %v201 = vpop.f32.mrf.mxu0
  %202 = vmatprep.mubr.f32.mxu0 %v31
  %203 = vmatmul.mubr.f32.gmra.mxu0 %v30
  %v204 = vpop.f32.mrf.mxu0
  %v205 = vadd.f32 0.0, %v204
  %v206 = vpop.f32.mrf.mxu0
  %207 = vmatprep.mubr.f32.mxu0 %v33
  %208 = vmatmul.mubr.f32.gmra.mxu0 %v32
  %v209 = vpop.f32.mrf.mxu0
  %v210 = vadd.f32 0.0, %v209
  %v211 = vpop.f32.mrf.mxu0
  %212 = vmatprep.mubr.f32.mxu0 %v35
  %213 = vmatmul.mubr.f32.gmra.mxu0 %v34
  %v214 = vpop.f32.mrf.mxu0
  %v215 = vadd.f32 0.0, %v214
  %v216 = vpop.f32.mrf.mxu0
  %217 = vmatprep.mubr.f32.mxu0 %v37
  %218 = vmatmul.mubr.f32.gmra.mxu0 %v36
  %v219 = vpop.f32.mrf.mxu0
  %v220 = vadd.f32 0.0, %v219
  %v221 = vpop.f32.mrf.mxu0
  %222 = vmatprep.mubr.f32.mxu0 %v39
  %223 = vmatmul.mubr.f32.gmra.mxu0 %v38
  %v224 = vpop.f32.mrf.mxu0
  %v225 = vadd.f32 0.0, %v224
  %v226 = vpop.f32.mrf.mxu0
  %227 = vmatprep.mubr.f32.mxu0 %v41
  %228 = vmatmul.mubr.f32.gmra.mxu0 %v40
  %v229 = vpop.f32.mrf.mxu0
  %v230 = vadd.f32 0.0, %v229
  %v231 = vpop.f32.mrf.mxu0
  %232 = vmatprep.mubr.f32.mxu0 %v43
  %233 = vmatmul.mubr.f32.gmra.mxu0 %v42
  %v234 = vpop.f32.mrf.mxu0
  %v235 = vadd.f32 0.0, %v234
  %v236 = vpop.f32.mrf.mxu0
  %237 = vmatprep.mubr.f32.mxu0 %v45
  %238 = vmatmul.mubr.f32.gmra.mxu0 %v44
  %v239 = vpop.f32.mrf.mxu0
  %v240 = vadd.f32 0.0, %v239
  %v241 = vpop.f32.mrf.mxu0
  %242 = vmatprep.mubr.f32.mxu0 %v47
  %243 = vmatmul.mubr.f32.gmra.mxu0 %v46
  %v244 = vpop.f32.mrf.mxu0
  %v245 = vadd.f32 0.0, %v244
  %v246 = vpop.f32.mrf.mxu0
  %247 = vmatprep.mubr.f32.mxu0 %v49
  %248 = vmatmul.mubr.f32.gmra.mxu0 %v48
  %v249 = vpop.f32.mrf.mxu0
  %v250 = vadd.f32 0.0, %v249
  %v251 = vpop.f32.mrf.mxu0
  %252 = vmatprep.mubr.f32.mxu0 %v51
  %253 = vmatmul.mubr.f32.gmra.mxu0 %v50
  %v254 = vpop.f32.mrf.mxu0
  %v255 = vadd.f32 0.0, %v254
  %v256 = vpop.f32.mrf.mxu0
  %257 = vmatprep.mubr.f32.mxu0 %v53
  %258 = vmatmul.mubr.f32.gmra.mxu0 %v52
  %v259 = vpop.f32.mrf.mxu0
  %v260 = vadd.f32 0.0, %v259
  %v261 = vpop.f32.mrf.mxu0
  %262 = vdwg.mxu0
  %s263 = scalar_lea.vmem %s4, 256
  %v264 = vld [vmem:[%s263] sm:$0xff]
  %v265 = vld [vmem:[%s263 + $0x8] sm:$0xff]
  %v266 = vld [vmem:[%s263 + $0x10] sm:$0xff]
  %v267 = vld [vmem:[%s263 + $0x18] sm:$0xff]
  %v268 = vld [vmem:[%s263 + $0x20] sm:$0xff]
  %v269 = vld [vmem:[%s263 + $0x28] sm:$0xff]
  %v270 = vld [vmem:[%s263 + $0x30] sm:$0xff]
  %v271 = vld [vmem:[%s263 + $0x38] sm:$0xff]
  %v272 = vld [vmem:[%s263 + $0x40] sm:$0xff]
  %v273 = vld [vmem:[%s263 + $0x48] sm:$0xff]
  %v274 = vld [vmem:[%s263 + $0x50] sm:$0xff]
  %v275 = vld [vmem:[%s263 + $0x58] sm:$0xff]
  %v276 = vld [vmem:[%s263 + $0x60] sm:$0xff]
  %v277 = vld [vmem:[%s263 + $0x68] sm:$0xff]
  %v278 = vld [vmem:[%s263 + $0x70] sm:$0xff]
  %v279 = vld [vmem:[%s263 + $0x78] sm:$0xff]
  %v280 = vld [vmem:[%s263 + $0x80] sm:$0xff]
  %v281 = vld [vmem:[%s263 + $0x88] sm:$0xff]
  %v282 = vld [vmem:[%s263 + $0x90] sm:$0xff]
  %v283 = vld [vmem:[%s263 + $0x98] sm:$0xff]
  %v284 = vld [vmem:[%s263 + $0xa0] sm:$0xff]
  %v285 = vld [vmem:[%s263 + $0xa8] sm:$0xff]
  %v286 = vld [vmem:[%s263 + $0xb0] sm:$0xff]
  %v287 = vld [vmem:[%s263 + $0xb8] sm:$0xff]
  %v288 = vld [vmem:[%s263 + $0xc0] sm:$0xff]
  %v289 = vld [vmem:[%s263 + $0xc8] sm:$0xff]
  %v290 = vld [vmem:[%s263 + $0xd0] sm:$0xff]
  %v291 = vld [vmem:[%s263 + $0xd8] sm:$0xff]
  %v292 = vld [vmem:[%s263 + $0xe0] sm:$0xff]
  %v293 = vld [vmem:[%s263 + $0xe8] sm:$0xff]
  %v294 = vld [vmem:[%s263 + $0xf0] sm:$0xff]
  %v295 = vld [vmem:[%s263 + $0xf8] sm:$0xff]
  %296 = vmatprep.subr.mxu0 0.0
  %297 = vmatpush1.msra.mxu0 %v279
  %298 = vmatprep.subr.mxu0 0.0
  %299 = vmatpush1.msra.mxu0 %v278
  %300 = vmatprep.subr.mxu0 0.0
  %301 = vmatpush1.msra.mxu0 %v277
  %302 = vmatprep.subr.mxu0 0.0
  %303 = vmatpush1.msra.mxu0 %v276
  %304 = vmatprep.subr.mxu0 0.0
  %305 = vmatpush1.msra.mxu0 %v275
  %306 = vmatprep.subr.mxu0 0.0
  %307 = vmatpush1.msra.mxu0 %v274
  %308 = vmatprep.subr.mxu0 0.0
  %309 = vmatpush1.msra.mxu0 %v273
  %310 = vmatprep.subr.mxu0 0.0
  %311 = vmatpush1.msra.mxu0 %v272
  %312 = vmatprep.subr.mxu0 0.0
  %313 = vmatpush1.msra.mxu0 %v271
  %314 = vmatprep.subr.mxu0 0.0
  %315 = vmatpush1.msra.mxu0 %v270
  %316 = vmatprep.subr.mxu0 0.0
  %317 = vmatpush1.msra.mxu0 %v269
  %318 = vmatprep.subr.mxu0 0.0
  %319 = vmatpush1.msra.mxu0 %v268
  %320 = vmatprep.subr.mxu0 0.0
  %321 = vmatpush1.msra.mxu0 %v267
  %322 = vmatprep.subr.mxu0 0.0
  %323 = vmatpush1.msra.mxu0 %v266
  %324 = vmatprep.subr.mxu0 0.0
  %325 = vmatpush1.msra.mxu0 %v265
  %326 = vmatprep.subr.mxu0 0.0
  %327 = vmatpush1.msra.mxu0 %v264
  %328 = vmatprep.subr.mxu0 0.0
  %329 = vmatpush2.msra.mxu0 %v295
  %330 = vmatprep.subr.mxu0 0.0
  %331 = vmatpush2.msra.mxu0 %v294
  %332 = vmatprep.subr.mxu0 0.0
  %333 = vmatpush2.msra.mxu0 %v293
  %334 = vmatprep.subr.mxu0 0.0
  %335 = vmatpush2.msra.mxu0 %v292
  %336 = vmatprep.subr.mxu0 0.0
  %337 = vmatpush2.msra.mxu0 %v291
  %338 = vmatprep.subr.mxu0 0.0
  %339 = vmatpush2.msra.mxu0 %v290
  %340 = vmatprep.subr.mxu0 0.0
  %341 = vmatpush2.msra.mxu0 %v289
  %342 = vmatprep.subr.mxu0 0.0
  %343 = vmatpush2.msra.mxu0 %v288
  %344 = vmatprep.subr.mxu0 0.0
  %345 = vmatpush2.msra.mxu0 %v287
  %346 = vmatprep.subr.mxu0 0.0
  %347 = vmatpush2.msra.mxu0 %v286
  %348 = vmatprep.subr.mxu0 0.0
  %349 = vmatpush2.msra.mxu0 %v285
  %350 = vmatprep.subr.mxu0 0.0
  %351 = vmatpush2.msra.mxu0 %v284
  %352 = vmatprep.subr.mxu0 0.0
  %353 = vmatpush2.msra.mxu0 %v283
  %354 = vmatprep.subr.mxu0 0.0
  %355 = vmatpush2.msra.mxu0 %v282
  %356 = vmatprep.subr.mxu0 0.0
  %357 = vmatpush2.msra.mxu0 %v281
  %358 = vmatprep.subr.mxu0 0.0
  %359 = vmatpush2.msra.mxu0 %v280
  %360 = vmatprep.mubr.f32.mxu0 %v23
  %361 = vmatmul.mubr.f32.gmra.mxu0 %v22
  %v362 = vpop.f32.mrf.mxu0
  %v363 = vadd.f32 0.0, %v362
  %v364 = vpop.f32.mrf.mxu0
  %365 = vmatprep.mubr.f32.mxu0 %v25
  %366 = vmatmul.mubr.f32.gmra.mxu0 %v24
  %v367 = vpop.f32.mrf.mxu0
  %v368 = vadd.f32 0.0, %v367
  %v369 = vpop.f32.mrf.mxu0
  %370 = vmatprep.mubr.f32.mxu0 %v27
  %371 = vmatmul.mubr.f32.gmra.mxu0 %v26
  %v372 = vpop.f32.mrf.mxu0
  %v373 = vadd.f32 0.0, %v372
  %v374 = vpop.f32.mrf.mxu0
  %375 = vmatprep.mubr.f32.mxu0 %v29
  %376 = vmatmul.mubr.f32.gmra.mxu0 %v28
  %v377 = vpop.f32.mrf.mxu0
  %v378 = vadd.f32 0.0, %v377
  %v379 = vpop.f32.mrf.mxu0
  %380 = vmatprep.mubr.f32.mxu0 %v31
  %381 = vmatmul.mubr.f32.gmra.mxu0 %v30
  %v382 = vpop.f32.mrf.mxu0
  %v383 = vadd.f32 0.0, %v382
  %v384 = vpop.f32.mrf.mxu0
  %385 = vmatprep.mubr.f32.mxu0 %v33
  %386 = vmatmul.mubr.f32.gmra.mxu0 %v32
  %v387 = vpop.f32.mrf.mxu0
  %v388 = vadd.f32 0.0, %v387
  %v389 = vpop.f32.mrf.mxu0
  %390 = vmatprep.mubr.f32.mxu0 %v35
  %391 = vmatmul.mubr.f32.gmra.mxu0 %v34
  %v392 = vpop.f32.mrf.mxu0
  %v393 = vadd.f32 0.0, %v392
  %v394 = vpop.f32.mrf.mxu0
  %395 = vmatprep.mubr.f32.mxu0 %v37
  %396 = vmatmul.mubr.f32.gmra.mxu0 %v36
  %v397 = vpop.f32.mrf.mxu0
  %v398 = vadd.f32 0.0, %v397
  %v399 = vpop.f32.mrf.mxu0
  %400 = vmatprep.mubr.f32.mxu0 %v39
  %401 = vmatmul.mubr.f32.gmra.mxu0 %v38
  %v402 = vpop.f32.mrf.mxu0
  %v403 = vadd.f32 0.0, %v402
  %v404 = vpop.f32.mrf.mxu0
  %405 = vmatprep.mubr.f32.mxu0 %v41
  %406 = vmatmul.mubr.f32.gmra.mxu0 %v40
  %v407 = vpop.f32.mrf.mxu0
  %v408 = vadd.f32 0.0, %v407
  %v409 = vpop.f32.mrf.mxu0
  %410 = vmatprep.mubr.f32.mxu0 %v43
  %411 = vmatmul.mubr.f32.gmra.mxu0 %v42
  %v412 = vpop.f32.mrf.mxu0
  %v413 = vadd.f32 0.0, %v412
  %v414 = vpop.f32.mrf.mxu0
  %415 = vmatprep.mubr.f32.mxu0 %v45
  %416 = vmatmul.mubr.f32.gmra.mxu0 %v44
  %v417 = vpop.f32.mrf.mxu0
  %v418 = vadd.f32 0.0, %v417
  %v419 = vpop.f32.mrf.mxu0
  %420 = vmatprep.mubr.f32.mxu0 %v47
  %421 = vmatmul.mubr.f32.gmra.mxu0 %v46
  %v422 = vpop.f32.mrf.mxu0
  %v423 = vadd.f32 0.0, %v422
  %v424 = vpop.f32.mrf.mxu0
  %425 = vmatprep.mubr.f32.mxu0 %v49
  %426 = vmatmul.mubr.f32.gmra.mxu0 %v48
  %v427 = vpop.f32.mrf.mxu0
  %v428 = vadd.f32 0.0, %v427
  %v429 = vpop.f32.mrf.mxu0
  %430 = vmatprep.mubr.f32.mxu0 %v51
  %431 = vmatmul.mubr.f32.gmra.mxu0 %v50
  %v432 = vpop.f32.mrf.mxu0
  %v433 = vadd.f32 0.0, %v432
  %v434 = vpop.f32.mrf.mxu0
  %435 = vmatprep.mubr.f32.mxu0 %v53
  %436 = vmatmul.mubr.f32.gmra.mxu0 %v52
  %v437 = vpop.f32.mrf.mxu0
  %v438 = vadd.f32 0.0, %v437
  %v439 = vpop.f32.mrf.mxu0
  %440 = vdwg.mxu0
  %v441 = vld [vmem:[%s5] sm:$0xff]
  %v442 = vld [vmem:[%s5 + $0x8] sm:$0xff]
  %v443 = vld [vmem:[%s5 + $0x10] sm:$0xff]
  %v444 = vld [vmem:[%s5 + $0x18] sm:$0xff]
  %v445 = vld [vmem:[%s5 + $0x20] sm:$0xff]
  %v446 = vld [vmem:[%s5 + $0x28] sm:$0xff]
  %v447 = vld [vmem:[%s5 + $0x30] sm:$0xff]
  %v448 = vld [vmem:[%s5 + $0x38] sm:$0xff]
  %v449 = vld [vmem:[%s5 + $0x40] sm:$0xff]
  %v450 = vld [vmem:[%s5 + $0x48] sm:$0xff]
  %v451 = vld [vmem:[%s5 + $0x50] sm:$0xff]
  %v452 = vld [vmem:[%s5 + $0x58] sm:$0xff]
  %v453 = vld [vmem:[%s5 + $0x60] sm:$0xff]
  %v454 = vld [vmem:[%s5 + $0x68] sm:$0xff]
  %v455 = vld [vmem:[%s5 + $0x70] sm:$0xff]
  %v456 = vld [vmem:[%s5 + $0x78] sm:$0xff]
  %457 = vmatprep.subr.mxu0 0.0
  %458 = vmatpush1.msra.mxu0 %v456
  %459 = vmatprep.subr.mxu0 0.0
  %460 = vmatpush1.msra.mxu0 %v455
  %461 = vmatprep.subr.mxu0 0.0
  %462 = vmatpush1.msra.mxu0 %v454
  %463 = vmatprep.subr.mxu0 0.0
  %464 = vmatpush1.msra.mxu0 %v453
  %465 = vmatprep.subr.mxu0 0.0
  %466 = vmatpush1.msra.mxu0 %v452
  %467 = vmatprep.subr.mxu0 0.0
  %468 = vmatpush1.msra.mxu0 %v451
  %469 = vmatprep.subr.mxu0 0.0
  %470 = vmatpush1.msra.mxu0 %v450
  %471 = vmatprep.subr.mxu0 0.0
  %472 = vmatpush1.msra.mxu0 %v449
  %473 = vmatprep.subr.mxu0 0.0
  %474 = vmatpush1.msra.mxu0 %v448
  %475 = vmatprep.subr.mxu0 0.0
  %476 = vmatpush1.msra.mxu0 %v447
  %477 = vmatprep.subr.mxu0 0.0
  %478 = vmatpush1.msra.mxu0 %v446
  %479 = vmatprep.subr.mxu0 0.0
  %480 = vmatpush1.msra.mxu0 %v445
  %481 = vmatprep.subr.mxu0 0.0
  %482 = vmatpush1.msra.mxu0 %v444
  %483 = vmatprep.subr.mxu0 0.0
  %484 = vmatpush1.msra.mxu0 %v443
  %485 = vmatprep.subr.mxu0 0.0
  %486 = vmatpush1.msra.mxu0 %v442
  %487 = vmatprep.subr.mxu0 0.0
  %488 = vmatpush1.msra.mxu0 %v441
  %489 = vmatprep.subr.mxu0 0.0
  %490 = vmatpush2.msra.mxu0 0.0
  %491 = vmatprep.subr.mxu0 0.0
  %492 = vmatpush2.msra.mxu0 0.0
  %493 = vmatprep.subr.mxu0 0.0
  %494 = vmatpush2.msra.mxu0 0.0
  %495 = vmatprep.subr.mxu0 0.0
  %496 = vmatpush2.msra.mxu0 0.0
  %497 = vmatprep.subr.mxu0 0.0
  %498 = vmatpush2.msra.mxu0 0.0
  %499 = vmatprep.subr.mxu0 0.0
  %500 = vmatpush2.msra.mxu0 0.0
  %501 = vmatprep.subr.mxu0 0.0
  %502 = vmatpush2.msra.mxu0 0.0
  %503 = vmatprep.subr.mxu0 0.0
  %504 = vmatpush2.msra.mxu0 0.0
  %505 = vmatprep.subr.mxu0 0.0
  %506 = vmatpush2.msra.mxu0 0.0
  %507 = vmatprep.subr.mxu0 0.0
  %508 = vmatpush2.msra.mxu0 0.0
  %509 = vmatprep.subr.mxu0 0.0
  %510 = vmatpush2.msra.mxu0 0.0
  %511 = vmatprep.subr.mxu0 0.0
  %512 = vmatpush2.msra.mxu0 0.0
  %513 = vmatprep.subr.mxu0 0.0
  %514 = vmatpush2.msra.mxu0 0.0
  %515 = vmatprep.subr.mxu0 0.0
  %516 = vmatpush2.msra.mxu0 0.0
  %517 = vmatprep.subr.mxu0 0.0
  %518 = vmatpush2.msra.mxu0 0.0
  %519 = vmatprep.subr.mxu0 0.0
  %520 = vmatpush2.msra.mxu0 0.0
  %521 = vmatprep.mubr.f32.mxu0 0.0
  %522 = vmatmul.mubr.f32.gmra.mxu0 %v54
  %v523 = vpop.f32.mrf.mxu0
  %v524 = vadd.f32 %v70, %v523
  %v525 = vpop.f32.mrf.mxu0
  %526 = vmatprep.mubr.f32.mxu0 0.0
  %527 = vmatmul.mubr.f32.gmra.mxu0 %v55
  %v528 = vpop.f32.mrf.mxu0
  %v529 = vadd.f32 %v71, %v528
  %v530 = vpop.f32.mrf.mxu0
  %531 = vmatprep.mubr.f32.mxu0 0.0
  %532 = vmatmul.mubr.f32.gmra.mxu0 %v56
  %v533 = vpop.f32.mrf.mxu0
  %v534 = vadd.f32 %v72, %v533
  %v535 = vpop.f32.mrf.mxu0
  %536 = vmatprep.mubr.f32.mxu0 0.0
  %537 = vmatmul.mubr.f32.gmra.mxu0 %v57
  %v538 = vpop.f32.mrf.mxu0
  %v539 = vadd.f32 %v73, %v538
  %v540 = vpop.f32.mrf.mxu0
  %541 = vmatprep.mubr.f32.mxu0 0.0
  %542 = vmatmul.mubr.f32.gmra.mxu0 %v58
  %v543 = vpop.f32.mrf.mxu0
  %v544 = vadd.f32 %v74, %v543
  %v545 = vpop.f32.mrf.mxu0
  %546 = vmatprep.mubr.f32.mxu0 0.0
  %547 = vmatmul.mubr.f32.gmra.mxu0 %v59
  %v548 = vpop.f32.mrf.mxu0
  %v549 = vadd.f32 %v75, %v548
  %v550 = vpop.f32.mrf.mxu0
  %551 = vmatprep.mubr.f32.mxu0 0.0
  %552 = vmatmul.mubr.f32.gmra.mxu0 %v60
  %v553 = vpop.f32.mrf.mxu0
  %v554 = vadd.f32 %v76, %v553
  %v555 = vpop.f32.mrf.mxu0
  %556 = vmatprep.mubr.f32.mxu0 0.0
  %557 = vmatmul.mubr.f32.gmra.mxu0 %v61
  %v558 = vpop.f32.mrf.mxu0
  %v559 = vadd.f32 %v77, %v558
  %v560 = vpop.f32.mrf.mxu0
  %561 = vmatprep.mubr.f32.mxu0 0.0
  %562 = vmatmul.mubr.f32.gmra.mxu0 %v62
  %v563 = vpop.f32.mrf.mxu0
  %v564 = vadd.f32 %v78, %v563
  %v565 = vpop.f32.mrf.mxu0
  %566 = vmatprep.mubr.f32.mxu0 0.0
  %567 = vmatmul.mubr.f32.gmra.mxu0 %v63
  %v568 = vpop.f32.mrf.mxu0
  %v569 = vadd.f32 %v79, %v568
  %v570 = vpop.f32.mrf.mxu0
  %571 = vmatprep.mubr.f32.mxu0 0.0
  %572 = vmatmul.mubr.f32.gmra.mxu0 %v64
  %v573 = vpop.f32.mrf.mxu0
  %v574 = vadd.f32 %v80, %v573
  %v575 = vpop.f32.mrf.mxu0
  %576 = vmatprep.mubr.f32.mxu0 0.0
  %577 = vmatmul.mubr.f32.gmra.mxu0 %v65
  %v578 = vpop.f32.mrf.mxu0
  %v579 = vadd.f32 %v81, %v578
  %v580 = vpop.f32.mrf.mxu0
  %581 = vmatprep.mubr.f32.mxu0 0.0
  %582 = vmatmul.mubr.f32.gmra.mxu0 %v66
  %v583 = vpop.f32.mrf.mxu0
  %v584 = vadd.f32 %v82, %v583
  %v585 = vpop.f32.mrf.mxu0
  %586 = vmatprep.mubr.f32.mxu0 0.0
  %587 = vmatmul.mubr.f32.gmra.mxu0 %v67
  %v588 = vpop.f32.mrf.mxu0
  %v589 = vadd.f32 %v83, %v588
  %v590 = vpop.f32.mrf.mxu0
  %591 = vmatprep.mubr.f32.mxu0 0.0
  %592 = vmatmul.mubr.f32.gmra.mxu0 %v68
  %v593 = vpop.f32.mrf.mxu0
  %v594 = vadd.f32 %v84, %v593
  %v595 = vpop.f32.mrf.mxu0
  %596 = vmatprep.mubr.f32.mxu0 0.0
  %597 = vmatmul.mubr.f32.gmra.mxu0 %v69
  %v598 = vpop.f32.mrf.mxu0
  %v599 = vadd.f32 %v85, %v598
  %v600 = vpop.f32.mrf.mxu0
  %601 = vdwg.mxu0
  %s602 = scalar_lea.vmem %s5, 128
  %v603 = vld [vmem:[%s602] sm:$0xff]
  %v604 = vld [vmem:[%s602 + $0x8] sm:$0xff]
  %v605 = vld [vmem:[%s602 + $0x10] sm:$0xff]
  %v606 = vld [vmem:[%s602 + $0x18] sm:$0xff]
  %v607 = vld [vmem:[%s602 + $0x20] sm:$0xff]
  %v608 = vld [vmem:[%s602 + $0x28] sm:$0xff]
  %v609 = vld [vmem:[%s602 + $0x30] sm:$0xff]
  %v610 = vld [vmem:[%s602 + $0x38] sm:$0xff]
  %v611 = vld [vmem:[%s602 + $0x40] sm:$0xff]
  %v612 = vld [vmem:[%s602 + $0x48] sm:$0xff]
  %v613 = vld [vmem:[%s602 + $0x50] sm:$0xff]
  %v614 = vld [vmem:[%s602 + $0x58] sm:$0xff]
  %v615 = vld [vmem:[%s602 + $0x60] sm:$0xff]
  %v616 = vld [vmem:[%s602 + $0x68] sm:$0xff]
  %v617 = vld [vmem:[%s602 + $0x70] sm:$0xff]
  %v618 = vld [vmem:[%s602 + $0x78] sm:$0xff]
  %619 = vmatprep.subr.mxu0 0.0
  %620 = vmatpush1.msra.mxu0 %v618
  %621 = vmatprep.subr.mxu0 0.0
  %622 = vmatpush1.msra.mxu0 %v617
  %623 = vmatprep.subr.mxu0 0.0
  %624 = vmatpush1.msra.mxu0 %v616
  %625 = vmatprep.subr.mxu0 0.0
  %626 = vmatpush1.msra.mxu0 %v615
  %627 = vmatprep.subr.mxu0 0.0
  %628 = vmatpush1.msra.mxu0 %v614
  %629 = vmatprep.subr.mxu0 0.0
  %630 = vmatpush1.msra.mxu0 %v613
  %631 = vmatprep.subr.mxu0 0.0
  %632 = vmatpush1.msra.mxu0 %v612
  %633 = vmatprep.subr.mxu0 0.0
  %634 = vmatpush1.msra.mxu0 %v611
  %635 = vmatprep.subr.mxu0 0.0
  %636 = vmatpush1.msra.mxu0 %v610
  %637 = vmatprep.subr.mxu0 0.0
  %638 = vmatpush1.msra.mxu0 %v609
  %639 = vmatprep.subr.mxu0 0.0
  %640 = vmatpush1.msra.mxu0 %v608
  %641 = vmatprep.subr.mxu0 0.0
  %642 = vmatpush1.msra.mxu0 %v607
  %643 = vmatprep.subr.mxu0 0.0
  %644 = vmatpush1.msra.mxu0 %v606
  %645 = vmatprep.subr.mxu0 0.0
  %646 = vmatpush1.msra.mxu0 %v605
  %647 = vmatprep.subr.mxu0 0.0
  %648 = vmatpush1.msra.mxu0 %v604
  %649 = vmatprep.subr.mxu0 0.0
  %650 = vmatpush1.msra.mxu0 %v603
  %651 = vmatprep.subr.mxu0 0.0
  %652 = vmatpush2.msra.mxu0 0.0
  %653 = vmatprep.subr.mxu0 0.0
  %654 = vmatpush2.msra.mxu0 0.0
  %655 = vmatprep.subr.mxu0 0.0
  %656 = vmatpush2.msra.mxu0 0.0
  %657 = vmatprep.subr.mxu0 0.0
  %658 = vmatpush2.msra.mxu0 0.0
  %659 = vmatprep.subr.mxu0 0.0
  %660 = vmatpush2.msra.mxu0 0.0
  %661 = vmatprep.subr.mxu0 0.0
  %662 = vmatpush2.msra.mxu0 0.0
  %663 = vmatprep.subr.mxu0 0.0
  %664 = vmatpush2.msra.mxu0 0.0
  %665 = vmatprep.subr.mxu0 0.0
  %666 = vmatpush2.msra.mxu0 0.0
  %667 = vmatprep.subr.mxu0 0.0
  %668 = vmatpush2.msra.mxu0 0.0
  %669 = vmatprep.subr.mxu0 0.0
  %670 = vmatpush2.msra.mxu0 0.0
  %671 = vmatprep.subr.mxu0 0.0
  %672 = vmatpush2.msra.mxu0 0.0
  %673 = vmatprep.subr.mxu0 0.0
  %674 = vmatpush2.msra.mxu0 0.0
  %675 = vmatprep.subr.mxu0 0.0
  %676 = vmatpush2.msra.mxu0 0.0
  %677 = vmatprep.subr.mxu0 0.0
  %678 = vmatpush2.msra.mxu0 0.0
  %679 = vmatprep.subr.mxu0 0.0
  %680 = vmatpush2.msra.mxu0 0.0
  %681 = vmatprep.subr.mxu0 0.0
  %682 = vmatpush2.msra.mxu0 0.0
  %683 = vmatprep.mubr.f32.mxu0 0.0
  %684 = vmatmul.mubr.f32.gmra.mxu0 %v54
  %v685 = vpop.f32.mrf.mxu0
  %v686 = vadd.f32 0.0, %v685
  %v687 = vpop.f32.mrf.mxu0
  %688 = vmatprep.mubr.f32.mxu0 0.0
  %689 = vmatmul.mubr.f32.gmra.mxu0 %v55
  %v690 = vpop.f32.mrf.mxu0
  %v691 = vadd.f32 0.0, %v690
  %v692 = vpop.f32.mrf.mxu0
  %693 = vmatprep.mubr.f32.mxu0 0.0
  %694 = vmatmul.mubr.f32.gmra.mxu0 %v56
  %v695 = vpop.f32.mrf.mxu0
  %v696 = vadd.f32 0.0, %v695
  %v697 = vpop.f32.mrf.mxu0
  %698 = vmatprep.mubr.f32.mxu0 0.0
  %699 = vmatmul.mubr.f32.gmra.mxu0 %v57
  %v700 = vpop.f32.mrf.mxu0
  %v701 = vadd.f32 0.0, %v700
  %v702 = vpop.f32.mrf.mxu0
  %703 = vmatprep.mubr.f32.mxu0 0.0
  %704 = vmatmul.mubr.f32.gmra.mxu0 %v58
  %v705 = vpop.f32.mrf.mxu0
  %v706 = vadd.f32 0.0, %v705
  %v707 = vpop.f32.mrf.mxu0
  %708 = vmatprep.mubr.f32.mxu0 0.0
  %709 = vmatmul.mubr.f32.gmra.mxu0 %v59
  %v710 = vpop.f32.mrf.mxu0
  %v711 = vadd.f32 0.0, %v710
  %v712 = vpop.f32.mrf.mxu0
  %713 = vmatprep.mubr.f32.mxu0 0.0
  %714 = vmatmul.mubr.f32.gmra.mxu0 %v60
  %v715 = vpop.f32.mrf.mxu0
  %v716 = vadd.f32 0.0, %v715
  %v717 = vpop.f32.mrf.mxu0
  %718 = vmatprep.mubr.f32.mxu0 0.0
  %719 = vmatmul.mubr.f32.gmra.mxu0 %v61
  %v720 = vpop.f32.mrf.mxu0
  %v721 = vadd.f32 0.0, %v720
  %v722 = vpop.f32.mrf.mxu0
  %723 = vmatprep.mubr.f32.mxu0 0.0
  %724 = vmatmul.mubr.f32.gmra.mxu0 %v62
  %v725 = vpop.f32.mrf.mxu0
  %v726 = vadd.f32 0.0, %v725
  %v727 = vpop.f32.mrf.mxu0
  %728 = vmatprep.mubr.f32.mxu0 0.0
  %729 = vmatmul.mubr.f32.gmra.mxu0 %v63
  %v730 = vpop.f32.mrf.mxu0
  %v731 = vadd.f32 0.0, %v730
  %v732 = vpop.f32.mrf.mxu0
  %733 = vmatprep.mubr.f32.mxu0 0.0
  %734 = vmatmul.mubr.f32.gmra.mxu0 %v64
  %v735 = vpop.f32.mrf.mxu0
  %v736 = vadd.f32 0.0, %v735
  %v737 = vpop.f32.mrf.mxu0
  %738 = vmatprep.mubr.f32.mxu0 0.0
  %739 = vmatmul.mubr.f32.gmra.mxu0 %v65
  %v740 = vpop.f32.mrf.mxu0
  %v741 = vadd.f32 0.0, %v740
  %v742 = vpop.f32.mrf.mxu0
  %743 = vmatprep.mubr.f32.mxu0 0.0
  %744 = vmatmul.mubr.f32.gmra.mxu0 %v66
  %v745 = vpop.f32.mrf.mxu0
  %v746 = vadd.f32 0.0, %v745
  %v747 = vpop.f32.mrf.mxu0
  %748 = vmatprep.mubr.f32.mxu0 0.0
  %749 = vmatmul.mubr.f32.gmra.mxu0 %v67
  %v750 = vpop.f32.mrf.mxu0
  %v751 = vadd.f32 0.0, %v750
  %v752 = vpop.f32.mrf.mxu0
  %753 = vmatprep.mubr.f32.mxu0 0.0
  %754 = vmatmul.mubr.f32.gmra.mxu0 %v68
  %v755 = vpop.f32.mrf.mxu0
  %v756 = vadd.f32 0.0, %v755
  %v757 = vpop.f32.mrf.mxu0
  %758 = vmatprep.mubr.f32.mxu0 0.0
  %759 = vmatmul.mubr.f32.gmra.mxu0 %v69
  %v760 = vpop.f32.mrf.mxu0
  %v761 = vadd.f32 0.0, %v760
  %v762 = vpop.f32.mrf.mxu0
  %763 = vdwg.mxu0
  %vm764 = vcmask 64512
  %v765 = vsel %vm764, %v185, -inf
  %766 = vmax.xlane.f32.xlu0 %v765
  %v767 = vpop.xlane.xlu0 %766
  %v768 = vsel %vm764, %v190, -inf
  %769 = vmax.xlane.f32.xlu0 %v768
  %v770 = vpop.xlane.xlu0 %769
  %v771 = vsel %vm764, %v195, -inf
  %772 = vmax.xlane.f32.xlu0 %v771
  %v773 = vpop.xlane.xlu0 %772
  %v774 = vsel %vm764, %v200, -inf
  %775 = vmax.xlane.f32.xlu0 %v774
  %v776 = vpop.xlane.xlu0 %775
  %v777 = vsel %vm764, %v205, -inf
  %778 = vmax.xlane.f32.xlu0 %v777
  %v779 = vpop.xlane.xlu0 %778
  %v780 = vsel %vm764, %v210, -inf
  %781 = vmax.xlane.f32.xlu0 %v780
  %v782 = vpop.xlane.xlu0 %781
  %v783 = vsel %vm764, %v215, -inf
  %784 = vmax.xlane.f32.xlu0 %v783
  %v785 = vpop.xlane.xlu0 %784
  %v786 = vsel %vm764, %v220, -inf
  %787 = vmax.xlane.f32.xlu0 %v786
  %v788 = vpop.xlane.xlu0 %787
  %v789 = vsel %vm764, %v225, -inf
  %790 = vmax.xlane.f32.xlu0 %v789
  %v791 = vpop.xlane.xlu0 %790
  %v792 = vsel %vm764, %v230, -inf
  %793 = vmax.xlane.f32.xlu0 %v792
  %v794 = vpop.xlane.xlu0 %793
  %v795 = vsel %vm764, %v235, -inf
  %796 = vmax.xlane.f32.xlu0 %v795
  %v797 = vpop.xlane.xlu0 %796
  %v798 = vsel %vm764, %v240, -inf
  %799 = vmax.xlane.f32.xlu0 %v798
  %v800 = vpop.xlane.xlu0 %799
  %v801 = vsel %vm764, %v245, -inf
  %802 = vmax.xlane.f32.xlu0 %v801
  %v803 = vpop.xlane.xlu0 %802
  %v804 = vsel %vm764, %v250, -inf
  %805 = vmax.xlane.f32.xlu0 %v804
  %v806 = vpop.xlane.xlu0 %805
  %v807 = vsel %vm764, %v255, -inf
  %808 = vmax.xlane.f32.xlu0 %v807
  %v809 = vpop.xlane.xlu0 %808
  %v810 = vsel %vm764, %v260, -inf
  %811 = vmax.xlane.f32.xlu0 %v810
  %v812 = vpop.xlane.xlu0 %811
  %v813 = vsub.f32 %v185, %v767
  %v814 = vsub.f32 %v190, %v770
  %v815 = vsub.f32 %v195, %v773
  %v816 = vsub.f32 %v200, %v776
  %v817 = vsub.f32 %v205, %v779
  %v818 = vsub.f32 %v210, %v782
  %v819 = vsub.f32 %v215, %v785
  %v820 = vsub.f32 %v220, %v788
  %v821 = vsub.f32 %v225, %v791
  %v822 = vsub.f32 %v230, %v794
  %v823 = vsub.f32 %v235, %v797
  %v824 = vsub.f32 %v240, %v800
  %v825 = vsub.f32 %v245, %v803
  %v826 = vsub.f32 %v250, %v806
  %v827 = vsub.f32 %v255, %v809
  %v828 = vsub.f32 %v260, %v812
  %v829 = vmul.f32 %v813, 1.442695
  %v830 = vpow.pop %v829
  %v831 = vmul.f32 %v814, 1.442695
  %v832 = vpow.pop %v831
  %v833 = vmul.f32 %v815, 1.442695
  %v834 = vpow.pop %v833
  %v835 = vmul.f32 %v816, 1.442695
  %v836 = vpow.pop %v835
  %v837 = vmul.f32 %v817, 1.442695
  %v838 = vpow.pop %v837
  %v839 = vmul.f32 %v818, 1.442695
  %v840 = vpow.pop %v839
  %v841 = vmul.f32 %v819, 1.442695
  %v842 = vpow.pop %v841
  %v843 = vmul.f32 %v820, 1.442695
  %v844 = vpow.pop %v843
  %v845 = vmul.f32 %v821, 1.442695
  %v846 = vpow.pop %v845
  %v847 = vmul.f32 %v822, 1.442695
  %v848 = vpow.pop %v847
  %v849 = vmul.f32 %v823, 1.442695
  %v850 = vpow.pop %v849
  %v851 = vmul.f32 %v824, 1.442695
  %v852 = vpow.pop %v851
  %v853 = vmul.f32 %v825, 1.442695
  %v854 = vpow.pop %v853
  %v855 = vmul.f32 %v826, 1.442695
  %v856 = vpow.pop %v855
  %v857 = vmul.f32 %v827, 1.442695
  %v858 = vpow.pop %v857
  %v859 = vmul.f32 %v828, 1.442695
  %v860 = vpow.pop %v859
  %v861 = vmul.f32 %v830, %v363
  %v862 = vmul.f32 %v832, %v368
  %v863 = vmul.f32 %v834, %v373
  %v864 = vmul.f32 %v836, %v378
  %v865 = vmul.f32 %v838, %v383
  %v866 = vmul.f32 %v840, %v388
  %v867 = vmul.f32 %v842, %v393
  %v868 = vmul.f32 %v844, %v398
  %v869 = vmul.f32 %v846, %v403
  %v870 = vmul.f32 %v848, %v408
  %v871 = vmul.f32 %v850, %v413
  %v872 = vmul.f32 %v852, %v418
  %v873 = vmul.f32 %v854, %v423
  %v874 = vmul.f32 %v856, %v428
  %v875 = vmul.f32 %v858, %v433
  %v876 = vmul.f32 %v860, %v438
  %v877 = vsel %vm764, %v861, 0.0
  %878 = vadd.xlane.f32.xlu0 %v877
  %v879 = vpop.xlane.xlu0 %878
  %v880 = vsel %vm764, %v862, 0.0
  %881 = vadd.xlane.f32.xlu0 %v880
  %v882 = vpop.xlane.xlu0 %881
  %v883 = vsel %vm764, %v863, 0.0
  %884 = vadd.xlane.f32.xlu0 %v883
  %v885 = vpop.xlane.xlu0 %884
  %v886 = vsel %vm764, %v864, 0.0
  %887 = vadd.xlane.f32.xlu0 %v886
  %v888 = vpop.xlane.xlu0 %887
  %v889 = vsel %vm764, %v865, 0.0
  %890 = vadd.xlane.f32.xlu0 %v889
  %v891 = vpop.xlane.xlu0 %890
  %v892 = vsel %vm764, %v866, 0.0
  %893 = vadd.xlane.f32.xlu0 %v892
  %v894 = vpop.xlane.xlu0 %893
  %v895 = vsel %vm764, %v867, 0.0
  %896 = vadd.xlane.f32.xlu0 %v895
  %v897 = vpop.xlane.xlu0 %896
  %v898 = vsel %vm764, %v868, 0.0
  %899 = vadd.xlane.f32.xlu0 %v898
  %v900 = vpop.xlane.xlu0 %899
  %v901 = vsel %vm764, %v869, 0.0
  %902 = vadd.xlane.f32.xlu0 %v901
  %v903 = vpop.xlane.xlu0 %902
  %v904 = vsel %vm764, %v870, 0.0
  %905 = vadd.xlane.f32.xlu0 %v904
  %v906 = vpop.xlane.xlu0 %905
  %v907 = vsel %vm764, %v871, 0.0
  %908 = vadd.xlane.f32.xlu0 %v907
  %v909 = vpop.xlane.xlu0 %908
  %v910 = vsel %vm764, %v872, 0.0
  %911 = vadd.xlane.f32.xlu0 %v910
  %v912 = vpop.xlane.xlu0 %911
  %v913 = vsel %vm764, %v873, 0.0
  %914 = vadd.xlane.f32.xlu0 %v913
  %v915 = vpop.xlane.xlu0 %914
  %v916 = vsel %vm764, %v874, 0.0
  %917 = vadd.xlane.f32.xlu0 %v916
  %v918 = vpop.xlane.xlu0 %917
  %v919 = vsel %vm764, %v875, 0.0
  %920 = vadd.xlane.f32.xlu0 %v919
  %v921 = vpop.xlane.xlu0 %920
  %v922 = vsel %vm764, %v876, 0.0
  %923 = vadd.xlane.f32.xlu0 %v922
  %v924 = vpop.xlane.xlu0 %923
  %v925 = vsel %vm764, %v830, 0.0
  %926 = vadd.xlane.f32.xlu0 %v925
  %v927 = vpop.xlane.xlu0 %926
  %v928 = vsel %vm764, %v832, 0.0
  %929 = vadd.xlane.f32.xlu0 %v928
  %v930 = vpop.xlane.xlu0 %929
  %v931 = vsel %vm764, %v834, 0.0
  %932 = vadd.xlane.f32.xlu0 %v931
  %v933 = vpop.xlane.xlu0 %932
  %v934 = vsel %vm764, %v836, 0.0
  %935 = vadd.xlane.f32.xlu0 %v934
  %v936 = vpop.xlane.xlu0 %935
  %v937 = vsel %vm764, %v838, 0.0
  %938 = vadd.xlane.f32.xlu0 %v937
  %v939 = vpop.xlane.xlu0 %938
  %v940 = vsel %vm764, %v840, 0.0
  %941 = vadd.xlane.f32.xlu0 %v940
  %v942 = vpop.xlane.xlu0 %941
  %v943 = vsel %vm764, %v842, 0.0
  %944 = vadd.xlane.f32.xlu0 %v943
  %v945 = vpop.xlane.xlu0 %944
  %v946 = vsel %vm764, %v844, 0.0
  %947 = vadd.xlane.f32.xlu0 %v946
  %v948 = vpop.xlane.xlu0 %947
  %v949 = vsel %vm764, %v846, 0.0
  %950 = vadd.xlane.f32.xlu0 %v949
  %v951 = vpop.xlane.xlu0 %950
  %v952 = vsel %vm764, %v848, 0.0
  %953 = vadd.xlane.f32.xlu0 %v952
  %v954 = vpop.xlane.xlu0 %953
  %v955 = vsel %vm764, %v850, 0.0
  %956 = vadd.xlane.f32.xlu0 %v955
  %v957 = vpop.xlane.xlu0 %956
  %v958 = vsel %vm764, %v852, 0.0
  %959 = vadd.xlane.f32.xlu0 %v958
  %v960 = vpop.xlane.xlu0 %959
  %v961 = vsel %vm764, %v854, 0.0
  %962 = vadd.xlane.f32.xlu0 %v961
  %v963 = vpop.xlane.xlu0 %962
  %v964 = vsel %vm764, %v856, 0.0
  %965 = vadd.xlane.f32.xlu0 %v964
  %v966 = vpop.xlane.xlu0 %965
  %v967 = vsel %vm764, %v858, 0.0
  %968 = vadd.xlane.f32.xlu0 %v967
  %v969 = vpop.xlane.xlu0 %968
  %v970 = vsel %vm764, %v860, 0.0
  %971 = vadd.xlane.f32.xlu0 %v970
  %v972 = vpop.xlane.xlu0 %971
  %v973 = vrcp.pop %v927
  %v974 = vmul.f32 %v879, %v973
  %v975 = vrcp.pop %v930
  %v976 = vmul.f32 %v882, %v975
  %v977 = vrcp.pop %v933
  %v978 = vmul.f32 %v885, %v977
  %v979 = vrcp.pop %v936
  %v980 = vmul.f32 %v888, %v979
  %v981 = vrcp.pop %v939
  %v982 = vmul.f32 %v891, %v981
  %v983 = vrcp.pop %v942
  %v984 = vmul.f32 %v894, %v983
  %v985 = vrcp.pop %v945
  %v986 = vmul.f32 %v897, %v985
  %v987 = vrcp.pop %v948
  %v988 = vmul.f32 %v900, %v987
  %v989 = vrcp.pop %v951
  %v990 = vmul.f32 %v903, %v989
  %v991 = vrcp.pop %v954
  %v992 = vmul.f32 %v906, %v991
  %v993 = vrcp.pop %v957
  %v994 = vmul.f32 %v909, %v993
  %v995 = vrcp.pop %v960
  %v996 = vmul.f32 %v912, %v995
  %v997 = vrcp.pop %v963
  %v998 = vmul.f32 %v915, %v997
  %v999 = vrcp.pop %v966
  %v1000 = vmul.f32 %v918, %v999
  %v1001 = vrcp.pop %v969
  %v1002 = vmul.f32 %v921, %v1001
  %v1003 = vrcp.pop %v972
  %v1004 = vmul.f32 %v924, %v1003
  %v1005 = vsel %vm764, %v524, -inf
  %1006 = vmax.xlane.f32.xlu0 %v1005
  %v1007 = vpop.xlane.xlu0 %1006
  %v1008 = vsel %vm764, %v529, -inf
  %1009 = vmax.xlane.f32.xlu0 %v1008
  %v1010 = vpop.xlane.xlu0 %1009
  %v1011 = vsel %vm764, %v534, -inf
  %1012 = vmax.xlane.f32.xlu0 %v1011
  %v1013 = vpop.xlane.xlu0 %1012
  %v1014 = vsel %vm764, %v539, -inf
  %1015 = vmax.xlane.f32.xlu0 %v1014
  %v1016 = vpop.xlane.xlu0 %1015
  %v1017 = vsel %vm764, %v544, -inf
  %1018 = vmax.xlane.f32.xlu0 %v1017
  %v1019 = vpop.xlane.xlu0 %1018
  %v1020 = vsel %vm764, %v549, -inf
  %1021 = vmax.xlane.f32.xlu0 %v1020
  %v1022 = vpop.xlane.xlu0 %1021
  %v1023 = vsel %vm764, %v554, -inf
  %1024 = vmax.xlane.f32.xlu0 %v1023
  %v1025 = vpop.xlane.xlu0 %1024
  %v1026 = vsel %vm764, %v559, -inf
  %1027 = vmax.xlane.f32.xlu0 %v1026
  %v1028 = vpop.xlane.xlu0 %1027
  %v1029 = vsel %vm764, %v564, -inf
  %1030 = vmax.xlane.f32.xlu0 %v1029
  %v1031 = vpop.xlane.xlu0 %1030
  %v1032 = vsel %vm764, %v569, -inf
  %1033 = vmax.xlane.f32.xlu0 %v1032
  %v1034 = vpop.xlane.xlu0 %1033
  %v1035 = vsel %vm764, %v574, -inf
  %1036 = vmax.xlane.f32.xlu0 %v1035
  %v1037 = vpop.xlane.xlu0 %1036
  %v1038 = vsel %vm764, %v579, -inf
  %1039 = vmax.xlane.f32.xlu0 %v1038
  %v1040 = vpop.xlane.xlu0 %1039
  %v1041 = vsel %vm764, %v584, -inf
  %1042 = vmax.xlane.f32.xlu0 %v1041
  %v1043 = vpop.xlane.xlu0 %1042
  %v1044 = vsel %vm764, %v589, -inf
  %1045 = vmax.xlane.f32.xlu0 %v1044
  %v1046 = vpop.xlane.xlu0 %1045
  %v1047 = vsel %vm764, %v594, -inf
  %1048 = vmax.xlane.f32.xlu0 %v1047
  %v1049 = vpop.xlane.xlu0 %1048
  %v1050 = vsel %vm764, %v599, -inf
  %1051 = vmax.xlane.f32.xlu0 %v1050
  %v1052 = vpop.xlane.xlu0 %1051
  %v1053 = vsub.f32 %v524, %v1007
  %v1054 = vsub.f32 %v529, %v1010
  %v1055 = vsub.f32 %v534, %v1013
  %v1056 = vsub.f32 %v539, %v1016
  %v1057 = vsub.f32 %v544, %v1019
  %v1058 = vsub.f32 %v549, %v1022
  %v1059 = vsub.f32 %v554, %v1025
  %v1060 = vsub.f32 %v559, %v1028
  %v1061 = vsub.f32 %v564, %v1031
  %v1062 = vsub.f32 %v569, %v1034
  %v1063 = vsub.f32 %v574, %v1037
  %v1064 = vsub.f32 %v579, %v1040
  %v1065 = vsub.f32 %v584, %v1043
  %v1066 = vsub.f32 %v589, %v1046
  %v1067 = vsub.f32 %v594, %v1049
  %v1068 = vsub.f32 %v599, %v1052
  %v1069 = vmul.f32 %v1053, 1.442695
  %v1070 = vpow.pop %v1069
  %v1071 = vmul.f32 %v1054, 1.442695
  %v1072 = vpow.pop %v1071
  %v1073 = vmul.f32 %v1055, 1.442695
  %v1074 = vpow.pop %v1073
  %v1075 = vmul.f32 %v1056, 1.442695
  %v1076 = vpow.pop %v1075
  %v1077 = vmul.f32 %v1057, 1.442695
  %v1078 = vpow.pop %v1077
  %v1079 = vmul.f32 %v1058, 1.442695
  %v1080 = vpow.pop %v1079
  %v1081 = vmul.f32 %v1059, 1.442695
  %v1082 = vpow.pop %v1081
  %v1083 = vmul.f32 %v1060, 1.442695
  %v1084 = vpow.pop %v1083
  %v1085 = vmul.f32 %v1061, 1.442695
  %v1086 = vpow.pop %v1085
  %v1087 = vmul.f32 %v1062, 1.442695
  %v1088 = vpow.pop %v1087
  %v1089 = vmul.f32 %v1063, 1.442695
  %v1090 = vpow.pop %v1089
  %v1091 = vmul.f32 %v1064, 1.442695
  %v1092 = vpow.pop %v1091
  %v1093 = vmul.f32 %v1065, 1.442695
  %v1094 = vpow.pop %v1093
  %v1095 = vmul.f32 %v1066, 1.442695
  %v1096 = vpow.pop %v1095
  %v1097 = vmul.f32 %v1067, 1.442695
  %v1098 = vpow.pop %v1097
  %v1099 = vmul.f32 %v1068, 1.442695
  %v1100 = vpow.pop %v1099
  %v1101 = vmul.f32 %v1070, %v686
  %v1102 = vmul.f32 %v1072, %v691
  %v1103 = vmul.f32 %v1074, %v696
  %v1104 = vmul.f32 %v1076, %v701
  %v1105 = vmul.f32 %v1078, %v706
  %v1106 = vmul.f32 %v1080, %v711
  %v1107 = vmul.f32 %v1082, %v716
  %v1108 = vmul.f32 %v1084, %v721
  %v1109 = vmul.f32 %v1086, %v726
  %v1110 = vmul.f32 %v1088, %v731
  %v1111 = vmul.f32 %v1090, %v736
  %v1112 = vmul.f32 %v1092, %v741
  %v1113 = vmul.f32 %v1094, %v746
  %v1114 = vmul.f32 %v1096, %v751
  %v1115 = vmul.f32 %v1098, %v756
  %v1116 = vmul.f32 %v1100, %v761
  %v1117 = vsel %vm764, %v1101, 0.0
  %1118 = vadd.xlane.f32.xlu0 %v1117
  %v1119 = vpop.xlane.xlu0 %1118
  %v1120 = vsel %vm764, %v1102, 0.0
  %1121 = vadd.xlane.f32.xlu0 %v1120
  %v1122 = vpop.xlane.xlu0 %1121
  %v1123 = vsel %vm764, %v1103, 0.0
  %1124 = vadd.xlane.f32.xlu0 %v1123
  %v1125 = vpop.xlane.xlu0 %1124
  %v1126 = vsel %vm764, %v1104, 0.0
  %1127 = vadd.xlane.f32.xlu0 %v1126
  %v1128 = vpop.xlane.xlu0 %1127
  %v1129 = vsel %vm764, %v1105, 0.0
  %1130 = vadd.xlane.f32.xlu0 %v1129
  %v1131 = vpop.xlane.xlu0 %1130
  %v1132 = vsel %vm764, %v1106, 0.0
  %1133 = vadd.xlane.f32.xlu0 %v1132
  %v1134 = vpop.xlane.xlu0 %1133
  %v1135 = vsel %vm764, %v1107, 0.0
  %1136 = vadd.xlane.f32.xlu0 %v1135
  %v1137 = vpop.xlane.xlu0 %1136
  %v1138 = vsel %vm764, %v1108, 0.0
  %1139 = vadd.xlane.f32.xlu0 %v1138
  %v1140 = vpop.xlane.xlu0 %1139
  %v1141 = vsel %vm764, %v1109, 0.0
  %1142 = vadd.xlane.f32.xlu0 %v1141
  %v1143 = vpop.xlane.xlu0 %1142
  %v1144 = vsel %vm764, %v1110, 0.0
  %1145 = vadd.xlane.f32.xlu0 %v1144
  %v1146 = vpop.xlane.xlu0 %1145
  %v1147 = vsel %vm764, %v1111, 0.0
  %1148 = vadd.xlane.f32.xlu0 %v1147
  %v1149 = vpop.xlane.xlu0 %1148
  %v1150 = vsel %vm764, %v1112, 0.0
  %1151 = vadd.xlane.f32.xlu0 %v1150
  %v1152 = vpop.xlane.xlu0 %1151
  %v1153 = vsel %vm764, %v1113, 0.0
  %1154 = vadd.xlane.f32.xlu0 %v1153
  %v1155 = vpop.xlane.xlu0 %1154
  %v1156 = vsel %vm764, %v1114, 0.0
  %1157 = vadd.xlane.f32.xlu0 %v1156
  %v1158 = vpop.xlane.xlu0 %1157
  %v1159 = vsel %vm764, %v1115, 0.0
  %1160 = vadd.xlane.f32.xlu0 %v1159
  %v1161 = vpop.xlane.xlu0 %1160
  %v1162 = vsel %vm764, %v1116, 0.0
  %1163 = vadd.xlane.f32.xlu0 %v1162
  %v1164 = vpop.xlane.xlu0 %1163
  %v1165 = vsel %vm764, %v1070, 0.0
  %1166 = vadd.xlane.f32.xlu0 %v1165
  %v1167 = vpop.xlane.xlu0 %1166
  %v1168 = vsel %vm764, %v1072, 0.0
  %1169 = vadd.xlane.f32.xlu0 %v1168
  %v1170 = vpop.xlane.xlu0 %1169
  %v1171 = vsel %vm764, %v1074, 0.0
  %1172 = vadd.xlane.f32.xlu0 %v1171
  %v1173 = vpop.xlane.xlu0 %1172
  %v1174 = vsel %vm764, %v1076, 0.0
  %1175 = vadd.xlane.f32.xlu0 %v1174
  %v1176 = vpop.xlane.xlu0 %1175
  %v1177 = vsel %vm764, %v1078, 0.0
  %1178 = vadd.xlane.f32.xlu0 %v1177
  %v1179 = vpop.xlane.xlu0 %1178
  %v1180 = vsel %vm764, %v1080, 0.0
  %1181 = vadd.xlane.f32.xlu0 %v1180
  %v1182 = vpop.xlane.xlu0 %1181
  %v1183 = vsel %vm764, %v1082, 0.0
  %1184 = vadd.xlane.f32.xlu0 %v1183
  %v1185 = vpop.xlane.xlu0 %1184
  %v1186 = vsel %vm764, %v1084, 0.0
  %1187 = vadd.xlane.f32.xlu0 %v1186
  %v1188 = vpop.xlane.xlu0 %1187
  %v1189 = vsel %vm764, %v1086, 0.0
  %1190 = vadd.xlane.f32.xlu0 %v1189
  %v1191 = vpop.xlane.xlu0 %1190
  %v1192 = vsel %vm764, %v1088, 0.0
  %1193 = vadd.xlane.f32.xlu0 %v1192
  %v1194 = vpop.xlane.xlu0 %1193
  %v1195 = vsel %vm764, %v1090, 0.0
  %1196 = vadd.xlane.f32.xlu0 %v1195
  %v1197 = vpop.xlane.xlu0 %1196
  %v1198 = vsel %vm764, %v1092, 0.0
  %1199 = vadd.xlane.f32.xlu0 %v1198
  %v1200 = vpop.xlane.xlu0 %1199
  %v1201 = vsel %vm764, %v1094, 0.0
  %1202 = vadd.xlane.f32.xlu0 %v1201
  %v1203 = vpop.xlane.xlu0 %1202
  %v1204 = vsel %vm764, %v1096, 0.0
  %1205 = vadd.xlane.f32.xlu0 %v1204
  %v1206 = vpop.xlane.xlu0 %1205
  %v1207 = vsel %vm764, %v1098, 0.0
  %1208 = vadd.xlane.f32.xlu0 %v1207
  %v1209 = vpop.xlane.xlu0 %1208
  %v1210 = vsel %vm764, %v1100, 0.0
  %1211 = vadd.xlane.f32.xlu0 %v1210
  %v1212 = vpop.xlane.xlu0 %1211
  %v1213 = vrcp.pop %v1167
  %v1214 = vmul.f32 %v1119, %v1213
  %v1215 = vrcp.pop %v1170
  %v1216 = vmul.f32 %v1122, %v1215
  %v1217 = vrcp.pop %v1173
  %v1218 = vmul.f32 %v1125, %v1217
  %v1219 = vrcp.pop %v1176
  %v1220 = vmul.f32 %v1128, %v1219
  %v1221 = vrcp.pop %v1179
  %v1222 = vmul.f32 %v1131, %v1221
  %v1223 = vrcp.pop %v1182
  %v1224 = vmul.f32 %v1134, %v1223
  %v1225 = vrcp.pop %v1185
  %v1226 = vmul.f32 %v1137, %v1225
  %v1227 = vrcp.pop %v1188
  %v1228 = vmul.f32 %v1140, %v1227
  %v1229 = vrcp.pop %v1191
  %v1230 = vmul.f32 %v1143, %v1229
  %v1231 = vrcp.pop %v1194
  %v1232 = vmul.f32 %v1146, %v1231
  %v1233 = vrcp.pop %v1197
  %v1234 = vmul.f32 %v1149, %v1233
  %v1235 = vrcp.pop %v1200
  %v1236 = vmul.f32 %v1152, %v1235
  %v1237 = vrcp.pop %v1203
  %v1238 = vmul.f32 %v1155, %v1237
  %v1239 = vrcp.pop %v1206
  %v1240 = vmul.f32 %v1158, %v1239
  %v1241 = vrcp.pop %v1209
  %v1242 = vmul.f32 %v1161, %v1241
  %v1243 = vrcp.pop %v1212
  %v1244 = vmul.f32 %v1164, %v1243
  %v1245 = vadd.f32 %v974, %v1214
  %v1246 = vadd.f32 %v976, %v1216
  %v1247 = vadd.f32 %v978, %v1218
  %v1248 = vadd.f32 %v980, %v1220
  %v1249 = vadd.f32 %v982, %v1222
  %v1250 = vadd.f32 %v984, %v1224
  %v1251 = vadd.f32 %v986, %v1226
  %v1252 = vadd.f32 %v988, %v1228
  %v1253 = vadd.f32 %v990, %v1230
  %v1254 = vadd.f32 %v992, %v1232
  %v1255 = vadd.f32 %v994, %v1234
  %v1256 = vadd.f32 %v996, %v1236
  %v1257 = vadd.f32 %v998, %v1238
  %v1258 = vadd.f32 %v1000, %v1240
  %v1259 = vadd.f32 %v1002, %v1242
  %v1260 = vadd.f32 %v1004, %v1244
  %s1261 = sld [smem:[#allocation3]]
  %v1262 = vstv %s1261
  %v1263 = vadd.f32 %v1245, %v1262
  %v1264 = vadd.f32 %v1246, %v1262
  %v1265 = vadd.f32 %v1247, %v1262
  %v1266 = vadd.f32 %v1248, %v1262
  %v1267 = vadd.f32 %v1249, %v1262
  %v1268 = vadd.f32 %v1250, %v1262
  %v1269 = vadd.f32 %v1251, %v1262
  %v1270 = vadd.f32 %v1252, %v1262
  %v1271 = vadd.f32 %v1253, %v1262
  %v1272 = vadd.f32 %v1254, %v1262
  %v1273 = vadd.f32 %v1255, %v1262
  %v1274 = vadd.f32 %v1256, %v1262
  %v1275 = vadd.f32 %v1257, %v1262
  %v1276 = vadd.f32 %v1258, %v1262
  %v1277 = vadd.f32 %v1259, %v1262
  %v1278 = vadd.f32 %v1260, %v1262
  %v1279 = vxor.u32 %v1263, 2147483648
  %v1280 = vxor.u32 %v1264, 2147483648
  %v1281 = vxor.u32 %v1265, 2147483648
  %v1282 = vxor.u32 %v1266, 2147483648
  %v1283 = vxor.u32 %v1267, 2147483648
  %v1284 = vxor.u32 %v1268, 2147483648
  %v1285 = vxor.u32 %v1269, 2147483648
  %v1286 = vxor.u32 %v1270, 2147483648
  %v1287 = vxor.u32 %v1271, 2147483648
  %v1288 = vxor.u32 %v1272, 2147483648
  %v1289 = vxor.u32 %v1273, 2147483648
  %v1290 = vxor.u32 %v1274, 2147483648
  %v1291 = vxor.u32 %v1275, 2147483648
  %v1292 = vxor.u32 %v1276, 2147483648
  %v1293 = vxor.u32 %v1277, 2147483648
  %v1294 = vxor.u32 %v1278, 2147483648
  %v1295 = vmul.f32 %v1279, 1.442695
  %v1296 = vpow.pop %v1295
  %v1297 = vmul.f32 %v1280, 1.442695
  %v1298 = vpow.pop %v1297
  %v1299 = vmul.f32 %v1281, 1.442695
  %v1300 = vpow.pop %v1299
  %v1301 = vmul.f32 %v1282, 1.442695
  %v1302 = vpow.pop %v1301
  %v1303 = vmul.f32 %v1283, 1.442695
  %v1304 = vpow.pop %v1303
  %v1305 = vmul.f32 %v1284, 1.442695
  %v1306 = vpow.pop %v1305
  %v1307 = vmul.f32 %v1285, 1.442695
  %v1308 = vpow.pop %v1307
  %v1309 = vmul.f32 %v1286, 1.442695
  %v1310 = vpow.pop %v1309
  %v1311 = vmul.f32 %v1287, 1.442695
  %v1312 = vpow.pop %v1311
  %v1313 = vmul.f32 %v1288, 1.442695
  %v1314 = vpow.pop %v1313
  %v1315 = vmul.f32 %v1289, 1.442695
  %v1316 = vpow.pop %v1315
  %v1317 = vmul.f32 %v1290, 1.442695
  %v1318 = vpow.pop %v1317
  %v1319 = vmul.f32 %v1291, 1.442695
  %v1320 = vpow.pop %v1319
  %v1321 = vmul.f32 %v1292, 1.442695
  %v1322 = vpow.pop %v1321
  %v1323 = vmul.f32 %v1293, 1.442695
  %v1324 = vpow.pop %v1323
  %v1325 = vmul.f32 %v1294, 1.442695
  %v1326 = vpow.pop %v1325
  %v1327 = vadd.f32 %v1296, 1.0
  %v1328 = vadd.f32 %v1298, 1.0
  %v1329 = vadd.f32 %v1300, 1.0
  %v1330 = vadd.f32 %v1302, 1.0
  %v1331 = vadd.f32 %v1304, 1.0
  %v1332 = vadd.f32 %v1306, 1.0
  %v1333 = vadd.f32 %v1308, 1.0
  %v1334 = vadd.f32 %v1310, 1.0
  %v1335 = vadd.f32 %v1312, 1.0
  %v1336 = vadd.f32 %v1314, 1.0
  %v1337 = vadd.f32 %v1316, 1.0
  %v1338 = vadd.f32 %v1318, 1.0
  %v1339 = vadd.f32 %v1320, 1.0
  %v1340 = vadd.f32 %v1322, 1.0
  %v1341 = vadd.f32 %v1324, 1.0
  %v1342 = vadd.f32 %v1326, 1.0
  %v1343 = vrcp.pop %v1327
  %v1344 = vmul.f32 1.0, %v1343
  %v1345 = vrcp.pop %v1328
  %v1346 = vmul.f32 1.0, %v1345
  %v1347 = vrcp.pop %v1329
  %v1348 = vmul.f32 1.0, %v1347
  %v1349 = vrcp.pop %v1330
  %v1350 = vmul.f32 1.0, %v1349
  %v1351 = vrcp.pop %v1331
  %v1352 = vmul.f32 1.0, %v1351
  %v1353 = vrcp.pop %v1332
  %v1354 = vmul.f32 1.0, %v1353
  %v1355 = vrcp.pop %v1333
  %v1356 = vmul.f32 1.0, %v1355
  %v1357 = vrcp.pop %v1334
  %v1358 = vmul.f32 1.0, %v1357
  %v1359 = vrcp.pop %v1335
  %v1360 = vmul.f32 1.0, %v1359
  %v1361 = vrcp.pop %v1336
  %v1362 = vmul.f32 1.0, %v1361
  %v1363 = vrcp.pop %v1337
  %v1364 = vmul.f32 1.0, %v1363
  %v1365 = vrcp.pop %v1338
  %v1366 = vmul.f32 1.0, %v1365
  %v1367 = vrcp.pop %v1339
  %v1368 = vmul.f32 1.0, %v1367
  %v1369 = vrcp.pop %v1340
  %v1370 = vmul.f32 1.0, %v1369
  %v1371 = vrcp.pop %v1341
  %v1372 = vmul.f32 1.0, %v1371
  %v1373 = vrcp.pop %v1342
  %v1374 = vmul.f32 1.0, %v1373
  %v1391 = vlaneseq
  %v1392 = vand.u32 %v1391, 127
  %v1393 = vlaneseq
  %v1394 = vshrl.u32 %v1393, 7
  %v1395 = vsub.s32 %v1392, %v1394
  %v1396 = vrot.slane %v1344, %v1395
  %v1397 = vadd.s32 %v1392, 4294967288
  %v1398 = vlaneseq
  %v1399 = vshrl.u32 %v1398, 7
  %v1400 = vsub.s32 %v1397, %v1399
  %v1401 = vrot.slane %v1346, %v1400
  %vm1402 = vcmask 130112
  %v1403 = vsel %vm1402, %v1401, %v1396
  %v1404 = vadd.s32 %v1392, 4294967280
  %v1405 = vlaneseq
  %v1406 = vshrl.u32 %v1405, 7
  %v1407 = vsub.s32 %v1404, %v1406
  %v1408 = vrot.slane %v1348, %v1407
  %vm1409 = vcmask 195712
  %v1410 = vsel %vm1409, %v1408, %v1403
  %v1411 = vadd.s32 %v1392, 4294967272
  %v1412 = vlaneseq
  %v1413 = vshrl.u32 %v1412, 7
  %v1414 = vsub.s32 %v1411, %v1413
  %v1415 = vrot.slane %v1350, %v1414
  %vm1416 = vcmask 261312
  %v1417 = vsel %vm1416, %v1415, %v1410
  %v1418 = vadd.s32 %v1392, 4294967264
  %v1419 = vlaneseq
  %v1420 = vshrl.u32 %v1419, 7
  %v1421 = vsub.s32 %v1418, %v1420
  %v1422 = vrot.slane %v1352, %v1421
  %vm1423 = vcmask 326912
  %v1424 = vsel %vm1423, %v1422, %v1417
  %v1425 = vadd.s32 %v1392, 4294967256
  %v1426 = vlaneseq
  %v1427 = vshrl.u32 %v1426, 7
  %v1428 = vsub.s32 %v1425, %v1427
  %v1429 = vrot.slane %v1354, %v1428
  %vm1430 = vcmask 392512
  %v1431 = vsel %vm1430, %v1429, %v1424
  %v1432 = vadd.s32 %v1392, 4294967248
  %v1433 = vlaneseq
  %v1434 = vshrl.u32 %v1433, 7
  %v1435 = vsub.s32 %v1432, %v1434
  %v1436 = vrot.slane %v1356, %v1435
  %vm1437 = vcmask 458112
  %v1438 = vsel %vm1437, %v1436, %v1431
  %v1439 = vadd.s32 %v1392, 4294967240
  %v1440 = vlaneseq
  %v1441 = vshrl.u32 %v1440, 7
  %v1442 = vsub.s32 %v1439, %v1441
  %v1443 = vrot.slane %v1358, %v1442
  %vm1444 = vcmask 523712
  %v1445 = vsel %vm1444, %v1443, %v1438
  %v1446 = vadd.s32 %v1392, 4294967232
  %v1447 = vlaneseq
  %v1448 = vshrl.u32 %v1447, 7
  %v1449 = vsub.s32 %v1446, %v1448
  %v1450 = vrot.slane %v1360, %v1449
  %vm1451 = vcmask 589312
  %v1452 = vsel %vm1451, %v1450, %v1445
  %v1453 = vadd.s32 %v1392, 4294967224
  %v1454 = vlaneseq
  %v1455 = vshrl.u32 %v1454, 7
  %v1456 = vsub.s32 %v1453, %v1455
  %v1457 = vrot.slane %v1362, %v1456
  %vm1458 = vcmask 654912
  %v1459 = vsel %vm1458, %v1457, %v1452
  %v1460 = vadd.s32 %v1392, 4294967216
  %v1461 = vlaneseq
  %v1462 = vshrl.u32 %v1461, 7
  %v1463 = vsub.s32 %v1460, %v1462
  %v1464 = vrot.slane %v1364, %v1463
  %vm1465 = vcmask 720512
  %v1466 = vsel %vm1465, %v1464, %v1459
  %v1467 = vadd.s32 %v1392, 4294967208
  %v1468 = vlaneseq
  %v1469 = vshrl.u32 %v1468, 7
  %v1470 = vsub.s32 %v1467, %v1469
  %v1471 = vrot.slane %v1366, %v1470
  %vm1472 = vcmask 786112
  %v1473 = vsel %vm1472, %v1471, %v1466
  %v1474 = vadd.s32 %v1392, 4294967200
  %v1475 = vlaneseq
  %v1476 = vshrl.u32 %v1475, 7
  %v1477 = vsub.s32 %v1474, %v1476
  %v1478 = vrot.slane %v1368, %v1477
  %vm1479 = vcmask 851712
  %v1480 = vsel %vm1479, %v1478, %v1473
  %v1481 = vadd.s32 %v1392, 4294967192
  %v1482 = vlaneseq
  %v1483 = vshrl.u32 %v1482, 7
  %v1484 = vsub.s32 %v1481, %v1483
  %v1485 = vrot.slane %v1370, %v1484
  %vm1486 = vcmask 917312
  %v1487 = vsel %vm1486, %v1485, %v1480
  %v1488 = vadd.s32 %v1392, 4294967184
  %v1489 = vlaneseq
  %v1490 = vshrl.u32 %v1489, 7
  %v1491 = vsub.s32 %v1488, %v1490
  %v1492 = vrot.slane %v1372, %v1491
  %vm1493 = vcmask 982912
  %v1494 = vsel %vm1493, %v1492, %v1487
  %v1495 = vadd.s32 %v1392, 4294967176
  %v1496 = vlaneseq
  %v1497 = vshrl.u32 %v1496, 7
  %v1498 = vsub.s32 %v1495, %v1497
  %v1499 = vrot.slane %v1374, %v1498
  %vm1500 = vcmask 1048512
  %v1501 = vsel %vm1500, %v1499, %v1494
  %1503 = vst [vmem:[%s6] sm:$0x1] %v1501
  // Predicated region
  $region22: #{glyco_peptide_ms2_ratio_output.1} parent=0 // pred_check
    _
  $region23: #{glyco_peptide_ms2_ratio_output.1} parent=0 // pred_check_branch
    %1505 = sbr.rel (0) target = $region25
  $region24: #{glyco_peptide_ms2_ratio_output.1} parent=0 // pred_region
    _
  $region25: #{glyco_peptide_ms2_ratio_output.1} parent=0 // pred_fallthru
    _
  // Predicated region
  $region26: #{glyco_peptide_ms2_ratio_output.1} parent=0 // pred_check
    _
  $region27: #{glyco_peptide_ms2_ratio_output.1} parent=0 // pred_check_branch
    %1507 = sbr.rel (0) target = $region29
  $region28: #{glyco_peptide_ms2_ratio_output.1} parent=0 // pred_region
    _
  $region29: #{glyco_peptide_ms2_ratio_output.1} parent=0 // pred_fallthru
    _

</llo_original>
